<compile_context>
chip_gen: v7x
topology: tpu7x:2x2x1
jax: 0.10.0
libtpu: 0.0.40
codegen_flags: <defaults>
</compile_context>

<pallas_src>
import functools

import jax
import jax.numpy as jnp
from jax import lax
from jax.experimental import pallas as pl
from jax.experimental.pallas import tpu as pltpu


def _silu(x):
    # x * sigmoid(x); sigmoid via tanh avoids an overflowing exp(-x) intermediate.
    return x * (0.5 * (jnp.tanh(0.5 * x) + 1.0))


def _softplus(x):
    # numerically-stable softplus using only exp/log/abs/max (Mosaic friendly)
    return jnp.maximum(x, 0.0) + jnp.log(1.0 + jnp.exp(-jnp.abs(x)))


def _mamba_kernel(x_ref,
                  w_in_ref, b_in_ref, w_bc_ref, b_bc_ref,
                  w_dt_ref, b_dt_ref, w_out_ref, b_out_ref,
                  neg_a_t_ref, d_ref,
                  out_ref,
                  xc_s, dt_s, bc_s, y_s, zg_s, da_s, h_s,
                  *, t_unroll):
    chunk = pl.program_id(1)
    d_state, d_inner = neg_a_t_ref.shape
    T = t_unroll

    x = x_ref[0]                                     # (chunk_len, d_model), bf16/f32

    # ---- fused in_proj; x/z split is a 128-aligned static lane slice --------
    xz = jnp.dot(x, w_in_ref[...],
                 preferred_element_type=jnp.float32) + b_in_ref[...]
    x_p = xz[:, :d_inner]
    z = xz[:, d_inner:]
    zg_s[...] = _silu(z)                             # gate, consumed after the scan

    # TODO(synk): use_conv=True branch (depthwise causal Conv1d) is not
    # implemented; the module's default use_conv=False path is reproduced.
    x_conv = _silu(x_p)
    xc_s[...] = x_conv
    xcm = x_conv.astype(w_bc_ref.dtype)

    # ---- fused B/C projection and f32 dt projection --------------------------
    bc_s[...] = jnp.dot(xcm, w_bc_ref[...],
                        preferred_element_type=jnp.float32) + b_bc_ref[...]
    dt_s[...] = _softplus(
        jnp.dot(x_conv, w_dt_ref[...], preferred_element_type=jnp.float32)
        + b_dt_ref[...])                             # f32 operands: feeds the exponent

    neg_a_t = neg_a_t_ref[...]                       # (d_state, d_inner) = -exp(A_log)^T

    # ---- selective scan: blocked, per-step chain is MXU-free ----------------
    # h_s carries state across the chunk axis.  Correctness relies on the grid
    # order (batch outer / "parallel", chunk inner / "arbitrary"): every batch
    # row starts at chunk 0 on whichever core runs it, so the reset below is
    # always seen before that row's later chunks.
    @pl.when(chunk == 0)
    def _():
        h_s[...] = jnp.zeros_like(h_s)

    chunk_len = xc_s.shape[0]
    num_blocks = chunk_len // T

    # (T, T) identity, hoisted out of the loop; used once per block as a
    # layout move turning (T, 2*d_state) rows into (2*d_state, T) columns.
    eye_t = (lax.broadcasted_iota(jnp.int32, (T, T), 0) ==
             lax.broadcasted_iota(jnp.int32, (T, T), 1)).astype(jnp.float32)

    def block_step(blk, h):                          # h: (d_state, d_inner) f32
        i0 = pl.multiple_of(blk * T, T)
        u_blk = xc_s[pl.ds(i0, T), :]                # (T, d_inner)   dense load
        dt_blk = dt_s[pl.ds(i0, T), :]               # (T, d_inner)   dense load
        w_blk = dt_blk * u_blk                       # (T, d_inner)
        bc_blk = bc_s[pl.ds(i0, T), :]               # (T, 2*d_state)
        # Single fused per-block layout transpose (off the serial chain).
        bct = lax.dot_general(bc_blk, eye_t, (((0,), (0,)), ((), ())),
                              preferred_element_type=jnp.float32)   # (2S, T)
        bt_blk = bct[:d_state, :]                    # B^T block (S, T)
        ct_blk = bct[d_state:, :]                    # C^T block (S, T)

        # Block-level dA precompute into scratch: EUP streams off the h chain
        # and the unrolled chain only loads 2-4 vregs per step.
        for t in range(T):
            da_s[t] = jnp.exp(dt_blk[t:t + 1, :] * neg_a_t).astype(da_s.dtype)

        ys = []
        for t in range(T):                           # Python unroll: LLO overlap
            dbu_t = bt_blk[:, t:t + 1] * w_blk[t:t + 1, :]      # (S, d_inner)
            h = h * da_s[t].astype(jnp.float32) + dbu_t         # serial: 2 VPU ops
            ys.append(jnp.sum(ct_blk[:, t:t + 1] * h,
                              axis=0, keepdims=True))           # (1, d_inner), XLU
        y_s[pl.ds(i0, T), :] = jnp.concatenate(ys, axis=0)      # dense store
        return h

    h_s[...] = lax.fori_loop(0, num_blocks, block_step, h_s[...])

    # ---- D skip (hoisted out of the scan) + gate + out_proj -----------------
    y = (y_s[...] + d_ref[...] * xc_s[...]) * zg_s[...]
    out = jnp.dot(y.astype(w_out_ref.dtype), w_out_ref[...],
                  preferred_element_type=jnp.float32) + b_out_ref[...]
    out_ref[0] = out.astype(out_ref.dtype)


def mamba_block_pallas(x, params, *, d_state, chunk_len=None, t_unroll=8,
                       use_bf16_matmul=True):
    batch, seq_len, d_model = x.shape
    d_inner = params["w_dt"].shape[0]

    # Default chunk: largest multiple-of-8 divisor of seq_len up to 512
    # (bigger chunks amortize per-grid-step overhead and fill the MXU M dim).
    if chunk_len is None:
        if seq_len <= 512:
            chunk_len = seq_len
        else:
            chunk_len = seq_len
            for cand in range(512, 7, -8):
                if seq_len % cand == 0:
                    chunk_len = cand
                    break
    t_unroll = max(1, min(t_unroll, chunk_len))
    while chunk_len % t_unroll:
        t_unroll -= 1
    assert seq_len % chunk_len == 0, "seq_len must be a multiple of chunk_len"
    assert chunk_len % 8 == 0 or chunk_len == seq_len, \
        "chunk_len must be a multiple of 8 (sublane tiling) or equal seq_len"
    n_chunks = seq_len // chunk_len

    # -- parameter prep (outside the kernel) ----------------------------------
    w_dtype = jnp.bfloat16 if use_bf16_matmul else jnp.float32
    da_dtype = jnp.bfloat16 if use_bf16_matmul else jnp.float32

    w_in = params["w_in"].astype(w_dtype)            # fused (d_model, 2*d_inner)
    b_in = params["b_in"].astype(jnp.float32)
    w_bc = params["w_x"].astype(w_dtype)             # fused (d_inner, 2*d_state)
    b_bc = params["b_x"].astype(jnp.float32)
    w_dt = params["w_dt"].astype(jnp.float32)        # keep f32: feeds the exponent
    b_dt = params["b_dt"].astype(jnp.float32)
    w_out = params["w_out"].astype(w_dtype)
    b_out = params["b_out"].astype(jnp.float32)
    neg_a_t = (-jnp.exp(params["a_log"].astype(jnp.float32))).T  # (d_state, d_inner)
    d_p = params["d"].astype(jnp.float32)            # (1, d_inner)

    # x is only consumed as MXU LHS: ship it bf16 in the bf16 path (halves DMA).
    x_in = x.astype(w_dtype) if use_bf16_matmul else x.astype(jnp.float32)

    consts = (w_in, b_in, w_bc, b_bc, w_dt, b_dt, w_out, b_out, neg_a_t, d_p)

    def _const_spec(arr):
        nd = arr.ndim
        return pl.BlockSpec(arr.shape, lambda *_, _nd=nd: (0,) * _nd)

    grid_spec = pltpu.PrefetchScalarGridSpec(
        num_scalar_prefetch=0,
        grid=(batch, n_chunks),
        in_specs=[pl.BlockSpec((1, chunk_len, d_model), lambda b, c: (b, c, 0))]
                 + [_const_spec(a) for a in consts],
        out_specs=pl.BlockSpec((1, chunk_len, d_model), lambda b, c: (b, c, 0)),
        scratch_shapes=[
            pltpu.VMEM((chunk_len, d_inner), jnp.float32),        # x_conv
            pltpu.VMEM((chunk_len, d_inner), jnp.float32),        # softplus(dt)
            pltpu.VMEM((chunk_len, 2 * d_state), jnp.float32),    # [B | C] rows
            pltpu.VMEM((chunk_len, d_inner), jnp.float32),        # y
            pltpu.VMEM((chunk_len, d_inner), jnp.float32),        # silu(z) gate
            pltpu.VMEM((t_unroll, d_state, d_inner), da_dtype),   # per-block dA
            pltpu.VMEM((d_state, d_inner), jnp.float32),          # h (carry)
        ],
    )

    # -- VMEM budget: generation-aware cap (v7x: 64 MiB/TC, v5e/v6e: 128 MiB) --
    try:
        vmem_cap = int(pltpu.get_tpu_info().vmem_capacity_bytes)
    except Exception:
        vmem_cap = 128 * 2 ** 20
    f32b = 4
    x_b = jnp.dtype(x_in.dtype).itemsize
    da_b = jnp.dtype(da_dtype).itemsize
    weight_bytes = sum(int(a.size) * a.dtype.itemsize for a in consts)
    scratch_bytes = ((4 * chunk_len * d_inner
                      + chunk_len * max(2 * d_state, 128)
                      + d_state * d_inner) * f32b
                     + t_unroll * d_state * d_inner * da_b)
    vmem_est = (scratch_bytes
                + 2 * chunk_len * d_model * (x_b + f32b)   # double-buffered x / out
                + 2 * weight_bytes                          # double-buffered consts
                + 6 * chunk_len * d_inner * f32b)           # live temporaries
    vmem_limit = int(min(max(1.5 * vmem_est, 32 * 2 ** 20), 0.75 * vmem_cap))

    tokens = batch * seq_len
    matmul_flops = 2 * tokens * (d_model * 2 * d_inner + d_inner * 2 * d_state
                                 + d_inner * d_inner + d_inner * d_model
                                 + t_unroll * 2 * d_state)
    scan_flops = 6 * tokens * d_state * d_inner
    cost = pl.CostEstimate(
        flops=int(matmul_flops + scan_flops),
        transcendentals=int(tokens * (d_state * d_inner + 4 * d_inner)),
        bytes_accessed=int(tokens * d_model * (x_b + f32b) + weight_bytes),
    )

    kernel = functools.partial(_mamba_kernel, t_unroll=t_unroll)
    return pl.pallas_call(
        kernel,
        out_shape=jax.ShapeDtypeStruct((batch, seq_len, d_model), jnp.float32),
        grid_spec=grid_spec,
        compiler_params=pltpu.CompilerParams(
            # batch "parallel" (megacore), chunks "arbitrary" (sequential carry)
            dimension_semantics=("parallel", "arbitrary"),
            vmem_limit_bytes=vmem_limit),
        cost_estimate=cost,
    )(x_in, *consts)


# ---------------------- pure-JAX reference (for checking) -------------------
def mamba_block_reference(x, params, *, d_state):
    hp = jax.lax.Precision.HIGHEST
    d_inner = params["w_dt"].shape[0]
    xz = jnp.dot(x, params["w_in"], precision=hp) + params["b_in"]
    x_p, z = xz[..., :d_inner], xz[..., d_inner:]
    x_conv = _silu(x_p)
    x_dbl = jnp.dot(x_conv, params["w_x"], precision=hp) + params["b_x"]
    B_seq, C_seq = x_dbl[..., :d_state], x_dbl[..., d_state:]
    dt = _softplus(jnp.dot(x_conv, params["w_dt"], precision=hp) + params["b_dt"])
    A = -jnp.exp(params["a_log"])                      # (d_inner, d_state)
    D = params["d"][0]                                 # (d_inner,)
    bsz, seq_len, _ = x.shape
    h = jnp.zeros((bsz, d_inner, d_state), jnp.float32)
    ys = []
    for i in range(seq_len):
        u_i = x_conv[:, i, :]
        delta_i = dt[:, i, :][..., None]
        B_i = B_seq[:, i, :][:, None, :]
        C_i = C_seq[:, i, :][:, None, :]
        dA = jnp.exp(delta_i * A[None])
        dB = delta_i * B_i
        h = h * dA + dB * u_i[..., None]
        ys.append(jnp.sum(h * C_i, axis=-1) + D * u_i)
    y = jnp.stack(ys, axis=1) * _silu(z)
    return jnp.dot(y, params["w_out"], precision=hp) + params["b_out"]


# ----------------------------- parameter setup ------------------------------
def init_params(key, d_model, d_state, d_inner):
    def linear(k, fin, fout):
        bound = 1.0 / jnp.sqrt(jnp.float32(fin))
        kw, kb = jax.random.split(k)
        w = jax.random.uniform(kw, (fin, fout), jnp.float32, -bound, bound)
        b = jax.random.uniform(kb, (1, fout), jnp.float32, -bound, bound)
        return w, b

    k_in, k_x, k_dt, k_out = jax.random.split(key, 4)
    w_in, b_in = linear(k_in, d_model, 2 * d_inner)
    w_x, b_x = linear(k_x, d_inner, 2 * d_state)
    w_dt, b_dt = linear(k_dt, d_inner, d_inner)
    w_out, b_out = linear(k_out, d_inner, d_model)

    # A_log = log(arange(1, d_state+1)) repeated over d_inner rows (module layout)
    a_log = jnp.log(jnp.tile(jnp.arange(1, d_state + 1, dtype=jnp.float32),
                             (d_inner, 1)))            # (d_inner, d_state)
    d_param = jnp.ones((1, d_inner), jnp.float32)

    return dict(w_in=w_in, b_in=b_in, w_x=w_x, b_x=b_x, w_dt=w_dt, b_dt=b_dt,
                w_out=w_out, b_out=b_out, a_log=a_log, d=d_param)


if __name__ == "__main__":
    d_model, d_state, expand = 128, 16, 2              # module default: d_model = 128
    d_inner = expand * d_model
    batch, seq_len = 2, 32

    key = jax.random.PRNGKey(0)
    k_params, k_x = jax.random.split(key)
    params = init_params(k_params, d_model, d_state, d_inner)
    x = jax.random.normal(k_x, (batch, seq_len, d_model), jnp.float32)

    ref = jax.block_until_ready(mamba_block_reference(x, params, d_state=d_state))

    # f32 path with two chunks (exercises cross-chunk h carry): tight check.
    out_f32 = jax.block_until_ready(
        mamba_block_pallas(x, params, d_state=d_state, chunk_len=16, t_unroll=8,
                           use_bf16_matmul=False))
    assert out_f32.shape == (batch, seq_len, d_model)
    err_f32 = float(jnp.max(jnp.abs(out_f32 - ref)))
    assert jnp.allclose(out_f32, ref, rtol=1e-2, atol=1e-2), \
        f"f32 max abs err = {err_f32}"

    # bf16 projections + bf16 dA storage, default chunk selection: looser check.
    out_bf16 = jax.block_until_ready(
        mamba_block_pallas(x, params, d_state=d_state, use_bf16_matmul=True))
    err_bf16 = float(jnp.max(jnp.abs(out_bf16 - ref)))
    assert jnp.allclose(out_bf16, ref, rtol=6e-2, atol=6e-2), \
        f"bf16 max abs err = {err_bf16}"

    print("KERNEL_OK")
</pallas_src>

<mosaic_0001>
module attributes {stable_mosaic.version = 11 : i64} {
  func.func @_mamba_kernel(%arg0: i32, %arg1: i32, %arg2: memref<1x16x128xf32, #tpu.memory_space<vmem>>, %arg3: memref<128x512xf32, #tpu.memory_space<vmem>>, %arg4: memref<1x512xf32, #tpu.memory_space<vmem>>, %arg5: memref<256x32xf32, #tpu.memory_space<vmem>>, %arg6: memref<1x32xf32, #tpu.memory_space<vmem>>, %arg7: memref<256x256xf32, #tpu.memory_space<vmem>>, %arg8: memref<1x256xf32, #tpu.memory_space<vmem>>, %arg9: memref<256x128xf32, #tpu.memory_space<vmem>>, %arg10: memref<1x128xf32, #tpu.memory_space<vmem>>, %arg11: memref<16x256xf32, #tpu.memory_space<vmem>>, %arg12: memref<1x256xf32, #tpu.memory_space<vmem>>, %arg13: memref<1x16x128xf32, #tpu.memory_space<vmem>>, %arg14: memref<16x256xf32, #tpu.memory_space<vmem>>, %arg15: memref<16x256xf32, #tpu.memory_space<vmem>>, %arg16: memref<16x32xf32, #tpu.memory_space<vmem>>, %arg17: memref<16x256xf32, #tpu.memory_space<vmem>>, %arg18: memref<16x256xf32, #tpu.memory_space<vmem>>, %arg19: memref<8x16x256xf32, #tpu.memory_space<vmem>>, %arg20: memref<16x256xf32, #tpu.memory_space<vmem>>) attributes {dimension_semantics = [#tpu.dimension_semantics<parallel>, #tpu.dimension_semantics<arbitrary>], iteration_bounds = array<i64: 2, 2>, scalar_prefetch = 0 : i64, scratch_operands = 7 : i64, tpu.core_type = #tpu.core_type<tc>, window_params = [{transform_indices = @transform_0, window_bounds = array<i64: 1, 16, 128>}, {pipeline_mode = #tpu.pipeline_mode<synchronous>, transform_indices = @transform_1, window_bounds = array<i64: 128, 512>}, {pipeline_mode = #tpu.pipeline_mode<synchronous>, transform_indices = @transform_2, window_bounds = array<i64: 1, 512>}, {pipeline_mode = #tpu.pipeline_mode<synchronous>, transform_indices = @transform_3, window_bounds = array<i64: 256, 32>}, {pipeline_mode = #tpu.pipeline_mode<synchronous>, transform_indices = @transform_4, window_bounds = array<i64: 1, 32>}, {pipeline_mode = #tpu.pipeline_mode<synchronous>, transform_indices = @transform_5, window_bounds = array<i64: 256, 256>}, {pipeline_mode = #tpu.pipeline_mode<synchronous>, transform_indices = @transform_6, window_bounds = array<i64: 1, 256>}, {pipeline_mode = #tpu.pipeline_mode<synchronous>, transform_indices = @transform_7, window_bounds = array<i64: 256, 128>}, {pipeline_mode = #tpu.pipeline_mode<synchronous>, transform_indices = @transform_8, window_bounds = array<i64: 1, 128>}, {pipeline_mode = #tpu.pipeline_mode<synchronous>, transform_indices = @transform_9, window_bounds = array<i64: 16, 256>}, {pipeline_mode = #tpu.pipeline_mode<synchronous>, transform_indices = @transform_10, window_bounds = array<i64: 1, 256>}, {transform_indices = @transform_11, window_bounds = array<i64: 1, 16, 128>}]} {
    %c0 = arith.constant 0 : index
    %c0_0 = arith.constant 0 : index
    %c0_1 = arith.constant 0 : index
    %0 = vector.load %arg2[%c0, %c0_0, %c0_1] : memref<1x16x128xf32, #tpu.memory_space<vmem>>, vector<1x16x128xf32>
    %1 = vector.shape_cast %0 : vector<1x16x128xf32> to vector<16x128xf32>
    %c0_2 = arith.constant 0 : index
    %c0_3 = arith.constant 0 : index
    %2 = vector.load %arg3[%c0_2, %c0_3] : memref<128x512xf32, #tpu.memory_space<vmem>>, vector<128x512xf32>
    %cst = arith.constant dense<0.000000e+00> : vector<16x512xf32>
    %3 = tpu.matmul %1, %2, %cst {dimension_numbers = #tpu.dot_dimension_numbers<[1], [0], [0], [1], [0, 0, 1, 1], [], []>} : vector<16x128xf32>, vector<128x512xf32>, vector<16x512xf32> -> vector<16x512xf32>
    %c0_4 = arith.constant 0 : index
    %c0_5 = arith.constant 0 : index
    %4 = vector.load %arg4[%c0_4, %c0_5] : memref<1x512xf32, #tpu.memory_space<vmem>>, vector<1x512xf32>
    %5 = vector.broadcast %4 : vector<1x512xf32> to vector<16x512xf32>
    %6 = arith.addf %3, %5 : vector<16x512xf32>
    %7 = vector.extract_strided_slice %6 {offsets = [0, 0], sizes = [16, 256], strides = [1, 1]} : vector<16x512xf32> to vector<16x256xf32>
    %8 = vector.extract_strided_slice %6 {offsets = [0, 256], sizes = [16, 256], strides = [1, 1]} : vector<16x512xf32> to vector<16x256xf32>
    %cst_6 = arith.constant 5.000000e-01 : f32
    %9 = vector.broadcast %cst_6 : f32 to vector<16x256xf32>
    %10 = arith.mulf %9, %8 : vector<16x256xf32>
    %11 = math.tanh %10 : vector<16x256xf32>
    %cst_7 = arith.constant 1.000000e+00 : f32
    %12 = vector.broadcast %cst_7 : f32 to vector<16x256xf32>
    %13 = arith.addf %11, %12 : vector<16x256xf32>
    %cst_8 = arith.constant 5.000000e-01 : f32
    %14 = vector.broadcast %cst_8 : f32 to vector<16x256xf32>
    %15 = arith.mulf %14, %13 : vector<16x256xf32>
    %16 = arith.mulf %8, %15 : vector<16x256xf32>
    %c0_9 = arith.constant 0 : index
    %c0_10 = arith.constant 0 : index
    %17 = vector.load %arg18[%c0_9, %c0_10] : memref<16x256xf32, #tpu.memory_space<vmem>>, vector<16x256xf32>
    tpu.vector_store %arg18[%c0_9, %c0_10], %16 {strides = array<i32>} : memref<16x256xf32, #tpu.memory_space<vmem>>, vector<16x256xf32>,
    %cst_11 = arith.constant 5.000000e-01 : f32
    %18 = vector.broadcast %cst_11 : f32 to vector<16x256xf32>
    %19 = arith.mulf %18, %7 : vector<16x256xf32>
    %20 = math.tanh %19 : vector<16x256xf32>
    %cst_12 = arith.constant 1.000000e+00 : f32
    %21 = vector.broadcast %cst_12 : f32 to vector<16x256xf32>
    %22 = arith.addf %20, %21 : vector<16x256xf32>
    %cst_13 = arith.constant 5.000000e-01 : f32
    %23 = vector.broadcast %cst_13 : f32 to vector<16x256xf32>
    %24 = arith.mulf %23, %22 : vector<16x256xf32>
    %25 = arith.mulf %7, %24 : vector<16x256xf32>
    %c0_14 = arith.constant 0 : index
    %c0_15 = arith.constant 0 : index
    %26 = vector.load %arg14[%c0_14, %c0_15] : memref<16x256xf32, #tpu.memory_space<vmem>>, vector<16x256xf32>
    tpu.vector_store %arg14[%c0_14, %c0_15], %25 {strides = array<i32>} : memref<16x256xf32, #tpu.memory_space<vmem>>, vector<16x256xf32>,
    %c0_16 = arith.constant 0 : index
    %c0_17 = arith.constant 0 : index
    %27 = vector.load %arg5[%c0_16, %c0_17] : memref<256x32xf32, #tpu.memory_space<vmem>>, vector<256x32xf32>
    %cst_18 = arith.constant dense<0.000000e+00> : vector<16x32xf32>
    %28 = tpu.matmul %25, %27, %cst_18 {dimension_numbers = #tpu.dot_dimension_numbers<[1], [0], [0], [1], [0, 0, 1, 1], [], []>} : vector<16x256xf32>, vector<256x32xf32>, vector<16x32xf32> -> vector<16x32xf32>
    %c0_19 = arith.constant 0 : index
    %c0_20 = arith.constant 0 : index
    %29 = vector.load %arg6[%c0_19, %c0_20] : memref<1x32xf32, #tpu.memory_space<vmem>>, vector<1x32xf32>
    %30 = vector.broadcast %29 : vector<1x32xf32> to vector<16x32xf32>
    %31 = arith.addf %28, %30 : vector<16x32xf32>
    %c0_21 = arith.constant 0 : index
    %c0_22 = arith.constant 0 : index
    %32 = vector.load %arg16[%c0_21, %c0_22] : memref<16x32xf32, #tpu.memory_space<vmem>>, vector<16x32xf32>
    tpu.vector_store %arg16[%c0_21, %c0_22], %31 {strides = array<i32>} : memref<16x32xf32, #tpu.memory_space<vmem>>, vector<16x32xf32>,
    %c0_23 = arith.constant 0 : index
    %c0_24 = arith.constant 0 : index
    %33 = vector.load %arg7[%c0_23, %c0_24] : memref<256x256xf32, #tpu.memory_space<vmem>>, vector<256x256xf32>
    %cst_25 = arith.constant dense<0.000000e+00> : vector<16x256xf32>
    %34 = tpu.matmul %25, %33, %cst_25 {dimension_numbers = #tpu.dot_dimension_numbers<[1], [0], [0], [1], [0, 0, 1, 1], [], []>} : vector<16x256xf32>, vector<256x256xf32>, vector<16x256xf32> -> vector<16x256xf32>
    %c0_26 = arith.constant 0 : index
    %c0_27 = arith.constant 0 : index
    %35 = vector.load %arg8[%c0_26, %c0_27] : memref<1x256xf32, #tpu.memory_space<vmem>>, vector<1x256xf32>
    %36 = vector.broadcast %35 : vector<1x256xf32> to vector<16x256xf32>
    %37 = arith.addf %34, %36 : vector<16x256xf32>
    %cst_28 = arith.constant 0.000000e+00 : f32
    %38 = vector.broadcast %cst_28 : f32 to vector<16x256xf32>
    %39 = arith.maximumf %37, %38 : vector<16x256xf32>
    %40 = math.absf %37 : vector<16x256xf32>
    %cst_29 = arith.constant 0.000000e+00 : f32
    %41 = vector.broadcast %cst_29 : f32 to vector<16x256xf32>
    %42 = arith.subf %41, %40 : vector<16x256xf32>
    %43 = math.exp %42 : vector<16x256xf32>
    %cst_30 = arith.constant 1.000000e+00 : f32
    %44 = vector.broadcast %cst_30 : f32 to vector<16x256xf32>
    %45 = arith.addf %44, %43 : vector<16x256xf32>
    %46 = math.log %45 : vector<16x256xf32>
    %47 = arith.addf %39, %46 : vector<16x256xf32>
    %c0_31 = arith.constant 0 : index
    %c0_32 = arith.constant 0 : index
    %48 = vector.load %arg15[%c0_31, %c0_32] : memref<16x256xf32, #tpu.memory_space<vmem>>, vector<16x256xf32>
    tpu.vector_store %arg15[%c0_31, %c0_32], %47 {strides = array<i32>} : memref<16x256xf32, #tpu.memory_space<vmem>>, vector<16x256xf32>,
    %c0_33 = arith.constant 0 : index
    %c0_34 = arith.constant 0 : index
    %49 = vector.load %arg11[%c0_33, %c0_34] : memref<16x256xf32, #tpu.memory_space<vmem>>, vector<16x256xf32>
    %c0_i32 = arith.constant 0 : i32
    %50 = arith.cmpi eq, %arg1, %c0_i32 : i32
    %51 = arith.extui %50 : i1 to i32
    %c0_i32_35 = arith.constant 0 : i32
    %52 = arith.cmpi ne, %51, %c0_i32_35 : i32
    scf.if %52 {
      %cst_58 = arith.constant 0.000000e+00 : f32
      %78 = vector.broadcast %cst_58 : f32 to vector<16x256xf32>
      %c0_59 = arith.constant 0 : index
      %c0_60 = arith.constant 0 : index
      %79 = vector.load %arg20[%c0_59, %c0_60] : memref<16x256xf32, #tpu.memory_space<vmem>>, vector<16x256xf32>
      tpu.vector_store %arg20[%c0_59, %c0_60], %78 {strides = array<i32>} : memref<16x256xf32, #tpu.memory_space<vmem>>, vector<16x256xf32>,
    } else {
    }
    %53 = tpu.iota {dimensions = array<i32: 0>} : vector<8x8xi32>
    %54 = tpu.iota {dimensions = array<i32: 1>} : vector<8x8xi32>
    %55 = arith.cmpi eq, %53, %54 : vector<8x8xi32>
    %56 = arith.extui %55 : vector<8x8xi1> to vector<8x8xi32>
    %57 = arith.sitofp %56 : vector<8x8xi32> to vector<8x8xf32>
    %c0_36 = arith.constant 0 : index
    %c0_37 = arith.constant 0 : index
    %58 = vector.load %arg20[%c0_36, %c0_37] : memref<16x256xf32, #tpu.memory_space<vmem>>, vector<16x256xf32>
    %c0_i32_38 = arith.constant 0 : i32
    %c2_i32 = arith.constant 2 : i32
    %59 = arith.addi %c0_i32_38, %c2_i32 : i32
    %c1_i32 = arith.constant 1 : i32
    %60 = scf.for %arg21 = %c0_i32_38 to %59 step %c1_i32 iter_args(%arg22 = %58) -> (vector<16x256xf32>)  : i32 {
      %c8_i32 = arith.constant 8 : i32
      %78 = arith.muli %arg21, %c8_i32 : i32
      %79 = tpu.assume_multiple %78, 8 : i32
      %80 = arith.index_cast %79 : i32 to index
      %c0_58 = arith.constant 0 : index
      %81 = vector.load %arg14[%80, %c0_58] : memref<16x256xf32, #tpu.memory_space<vmem>>, vector<8x256xf32>
      %82 = arith.index_cast %79 : i32 to index
      %c0_59 = arith.constant 0 : index
      %83 = vector.load %arg15[%82, %c0_59] : memref<16x256xf32, #tpu.memory_space<vmem>>, vector<8x256xf32>
      %84 = arith.mulf %83, %81 : vector<8x256xf32>
      %85 = arith.index_cast %79 : i32 to index
      %c0_60 = arith.constant 0 : index
      %86 = vector.load %arg16[%85, %c0_60] : memref<16x32xf32, #tpu.memory_space<vmem>>, vector<8x32xf32>
      %cst_61 = arith.constant dense<0.000000e+00> : vector<32x8xf32>
      %87 = tpu.matmul %86, %57, %cst_61 {dimension_numbers = #tpu.dot_dimension_numbers<[0], [0], [1], [1], [0, 1, 1, 1], [], []>} : vector<8x32xf32>, vector<8x8xf32>, vector<32x8xf32> -> vector<32x8xf32>
      %88 = vector.extract_strided_slice %87 {offsets = [0, 0], sizes = [16, 8], strides = [1, 1]} : vector<32x8xf32> to vector<16x8xf32>
      %89 = vector.extract_strided_slice %87 {offsets = [16, 0], sizes = [16, 8], strides = [1, 1]} : vector<32x8xf32> to vector<16x8xf32>
      %90 = vector.extract_strided_slice %83 {offsets = [0, 0], sizes = [1, 256], strides = [1, 1]} : vector<8x256xf32> to vector<1x256xf32>
      %91 = vector.broadcast %90 : vector<1x256xf32> to vector<16x256xf32>
      %92 = arith.mulf %91, %49 : vector<16x256xf32>
      %93 = math.exp %92 : vector<16x256xf32>
      %c0_62 = arith.constant 0 : index
      %c0_63 = arith.constant 0 : index
      %c0_64 = arith.constant 0 : index
      %94 = vector.load %arg19[%c0_62, %c0_63, %c0_64] : memref<8x16x256xf32, #tpu.memory_space<vmem>>, vector<1x16x256xf32>
      %95 = vector.shape_cast %94 : vector<1x16x256xf32> to vector<16x256xf32>
      %96 = vector.shape_cast %93 : vector<16x256xf32> to vector<1x16x256xf32>
      tpu.vector_store %arg19[%c0_62, %c0_63, %c0_64], %96 {strides = array<i32>} : memref<8x16x256xf32, #tpu.memory_space<vmem>>, vector<1x16x256xf32>,
      %97 = vector.extract_strided_slice %83 {offsets = [1, 0], sizes = [1, 256], strides = [1, 1]} : vector<8x256xf32> to vector<1x256xf32>
      %98 = vector.broadcast %97 : vector<1x256xf32> to vector<16x256xf32>
      %99 = arith.mulf %98, %49 : vector<16x256xf32>
      %100 = math.exp %99 : vector<16x256xf32>
      %c1 = arith.constant 1 : index
      %c0_65 = arith.constant 0 : index
      %c0_66 = arith.constant 0 : index
      %101 = vector.load %arg19[%c1, %c0_65, %c0_66] : memref<8x16x256xf32, #tpu.memory_space<vmem>>, vector<1x16x256xf32>
      %102 = vector.shape_cast %101 : vector<1x16x256xf32> to vector<16x256xf32>
      %103 = vector.shape_cast %100 : vector<16x256xf32> to vector<1x16x256xf32>
      tpu.vector_store %arg19[%c1, %c0_65, %c0_66], %103 {strides = array<i32>} : memref<8x16x256xf32, #tpu.memory_space<vmem>>, vector<1x16x256xf32>,
      %104 = vector.extract_strided_slice %83 {offsets = [2, 0], sizes = [1, 256], strides = [1, 1]} : vector<8x256xf32> to vector<1x256xf32>
      %105 = vector.broadcast %104 : vector<1x256xf32> to vector<16x256xf32>
      %106 = arith.mulf %105, %49 : vector<16x256xf32>
      %107 = math.exp %106 : vector<16x256xf32>
      %c2 = arith.constant 2 : index
      %c0_67 = arith.constant 0 : index
      %c0_68 = arith.constant 0 : index
      %108 = vector.load %arg19[%c2, %c0_67, %c0_68] : memref<8x16x256xf32, #tpu.memory_space<vmem>>, vector<1x16x256xf32>
      %109 = vector.shape_cast %108 : vector<1x16x256xf32> to vector<16x256xf32>
      %110 = vector.shape_cast %107 : vector<16x256xf32> to vector<1x16x256xf32>
      tpu.vector_store %arg19[%c2, %c0_67, %c0_68], %110 {strides = array<i32>} : memref<8x16x256xf32, #tpu.memory_space<vmem>>, vector<1x16x256xf32>,
      %111 = vector.extract_strided_slice %83 {offsets = [3, 0], sizes = [1, 256], strides = [1, 1]} : vector<8x256xf32> to vector<1x256xf32>
      %112 = vector.broadcast %111 : vector<1x256xf32> to vector<16x256xf32>
      %113 = arith.mulf %112, %49 : vector<16x256xf32>
      %114 = math.exp %113 : vector<16x256xf32>
      %c3 = arith.constant 3 : index
      %c0_69 = arith.constant 0 : index
      %c0_70 = arith.constant 0 : index
      %115 = vector.load %arg19[%c3, %c0_69, %c0_70] : memref<8x16x256xf32, #tpu.memory_space<vmem>>, vector<1x16x256xf32>
      %116 = vector.shape_cast %115 : vector<1x16x256xf32> to vector<16x256xf32>
      %117 = vector.shape_cast %114 : vector<16x256xf32> to vector<1x16x256xf32>
      tpu.vector_store %arg19[%c3, %c0_69, %c0_70], %117 {strides = array<i32>} : memref<8x16x256xf32, #tpu.memory_space<vmem>>, vector<1x16x256xf32>,
      %118 = vector.extract_strided_slice %83 {offsets = [4, 0], sizes = [1, 256], strides = [1, 1]} : vector<8x256xf32> to vector<1x256xf32>
      %119 = vector.broadcast %118 : vector<1x256xf32> to vector<16x256xf32>
      %120 = arith.mulf %119, %49 : vector<16x256xf32>
      %121 = math.exp %120 : vector<16x256xf32>
      %c4 = arith.constant 4 : index
      %c0_71 = arith.constant 0 : index
      %c0_72 = arith.constant 0 : index
      %122 = vector.load %arg19[%c4, %c0_71, %c0_72] : memref<8x16x256xf32, #tpu.memory_space<vmem>>, vector<1x16x256xf32>
      %123 = vector.shape_cast %122 : vector<1x16x256xf32> to vector<16x256xf32>
      %124 = vector.shape_cast %121 : vector<16x256xf32> to vector<1x16x256xf32>
      tpu.vector_store %arg19[%c4, %c0_71, %c0_72], %124 {strides = array<i32>} : memref<8x16x256xf32, #tpu.memory_space<vmem>>, vector<1x16x256xf32>,
      %125 = vector.extract_strided_slice %83 {offsets = [5, 0], sizes = [1, 256], strides = [1, 1]} : vector<8x256xf32> to vector<1x256xf32>
      %126 = vector.broadcast %125 : vector<1x256xf32> to vector<16x256xf32>
      %127 = arith.mulf %126, %49 : vector<16x256xf32>
      %128 = math.exp %127 : vector<16x256xf32>
      %c5 = arith.constant 5 : index
      %c0_73 = arith.constant 0 : index
      %c0_74 = arith.constant 0 : index
      %129 = vector.load %arg19[%c5, %c0_73, %c0_74] : memref<8x16x256xf32, #tpu.memory_space<vmem>>, vector<1x16x256xf32>
      %130 = vector.shape_cast %129 : vector<1x16x256xf32> to vector<16x256xf32>
      %131 = vector.shape_cast %128 : vector<16x256xf32> to vector<1x16x256xf32>
      tpu.vector_store %arg19[%c5, %c0_73, %c0_74], %131 {strides = array<i32>} : memref<8x16x256xf32, #tpu.memory_space<vmem>>, vector<1x16x256xf32>,
      %132 = vector.extract_strided_slice %83 {offsets = [6, 0], sizes = [1, 256], strides = [1, 1]} : vector<8x256xf32> to vector<1x256xf32>
      %133 = vector.broadcast %132 : vector<1x256xf32> to vector<16x256xf32>
      %134 = arith.mulf %133, %49 : vector<16x256xf32>
      %135 = math.exp %134 : vector<16x256xf32>
      %c6 = arith.constant 6 : index
      %c0_75 = arith.constant 0 : index
      %c0_76 = arith.constant 0 : index
      %136 = vector.load %arg19[%c6, %c0_75, %c0_76] : memref<8x16x256xf32, #tpu.memory_space<vmem>>, vector<1x16x256xf32>
      %137 = vector.shape_cast %136 : vector<1x16x256xf32> to vector<16x256xf32>
      %138 = vector.shape_cast %135 : vector<16x256xf32> to vector<1x16x256xf32>
      tpu.vector_store %arg19[%c6, %c0_75, %c0_76], %138 {strides = array<i32>} : memref<8x16x256xf32, #tpu.memory_space<vmem>>, vector<1x16x256xf32>,
      %139 = vector.extract_strided_slice %83 {offsets = [7, 0], sizes = [1, 256], strides = [1, 1]} : vector<8x256xf32> to vector<1x256xf32>
      %140 = vector.broadcast %139 : vector<1x256xf32> to vector<16x256xf32>
      %141 = arith.mulf %140, %49 : vector<16x256xf32>
      %142 = math.exp %141 : vector<16x256xf32>
      %c7 = arith.constant 7 : index
      %c0_77 = arith.constant 0 : index
      %c0_78 = arith.constant 0 : index
      %143 = vector.load %arg19[%c7, %c0_77, %c0_78] : memref<8x16x256xf32, #tpu.memory_space<vmem>>, vector<1x16x256xf32>
      %144 = vector.shape_cast %143 : vector<1x16x256xf32> to vector<16x256xf32>
      %145 = vector.shape_cast %142 : vector<16x256xf32> to vector<1x16x256xf32>
      tpu.vector_store %arg19[%c7, %c0_77, %c0_78], %145 {strides = array<i32>} : memref<8x16x256xf32, #tpu.memory_space<vmem>>, vector<1x16x256xf32>,
      %146 = vector.extract_strided_slice %88 {offsets = [0, 0], sizes = [16, 1], strides = [1, 1]} : vector<16x8xf32> to vector<16x1xf32>
      %147 = vector.extract_strided_slice %84 {offsets = [0, 0], sizes = [1, 256], strides = [1, 1]} : vector<8x256xf32> to vector<1x256xf32>
      %148 = vector.broadcast %146 : vector<16x1xf32> to vector<16x256xf32>
      %149 = vector.broadcast %147 : vector<1x256xf32> to vector<16x256xf32>
      %150 = arith.mulf %148, %149 : vector<16x256xf32>
      %c0_79 = arith.constant 0 : index
      %c0_80 = arith.constant 0 : index
      %c0_81 = arith.constant 0 : index
      %151 = vector.load %arg19[%c0_79, %c0_80, %c0_81] : memref<8x16x256xf32, #tpu.memory_space<vmem>>, vector<1x16x256xf32>
      %152 = vector.shape_cast %151 : vector<1x16x256xf32> to vector<16x256xf32>
      %153 = arith.mulf %arg22, %152 : vector<16x256xf32>
      %154 = arith.addf %153, %150 : vector<16x256xf32>
      %155 = vector.extract_strided_slice %89 {offsets = [0, 0], sizes = [16, 1], strides = [1, 1]} : vector<16x8xf32> to vector<16x1xf32>
      %156 = vector.broadcast %155 : vector<16x1xf32> to vector<16x256xf32>
      %157 = arith.mulf %156, %154 : vector<16x256xf32>
      %cst_82 = arith.constant dense<0.000000e+00> : vector<256xf32>
      %158 = vector.multi_reduction <add>, %157, %cst_82 [0] : vector<16x256xf32> to vector<256xf32>
      %159 = vector.shape_cast %158 : vector<256xf32> to vector<1x256xf32>
      %160 = vector.extract_strided_slice %88 {offsets = [0, 1], sizes = [16, 1], strides = [1, 1]} : vector<16x8xf32> to vector<16x1xf32>
      %161 = vector.extract_strided_slice %84 {offsets = [1, 0], sizes = [1, 256], strides = [1, 1]} : vector<8x256xf32> to vector<1x256xf32>
      %162 = vector.broadcast %160 : vector<16x1xf32> to vector<16x256xf32>
      %163 = vector.broadcast %161 : vector<1x256xf32> to vector<16x256xf32>
      %164 = arith.mulf %162, %163 : vector<16x256xf32>
      %c1_83 = arith.constant 1 : index
      %c0_84 = arith.constant 0 : index
      %c0_85 = arith.constant 0 : index
      %165 = vector.load %arg19[%c1_83, %c0_84, %c0_85] : memref<8x16x256xf32, #tpu.memory_space<vmem>>, vector<1x16x256xf32>
      %166 = vector.shape_cast %165 : vector<1x16x256xf32> to vector<16x256xf32>
      %167 = arith.mulf %154, %166 : vector<16x256xf32>
      %168 = arith.addf %167, %164 : vector<16x256xf32>
      %169 = vector.extract_strided_slice %89 {offsets = [0, 1], sizes = [16, 1], strides = [1, 1]} : vector<16x8xf32> to vector<16x1xf32>
      %170 = vector.broadcast %169 : vector<16x1xf32> to vector<16x256xf32>
      %171 = arith.mulf %170, %168 : vector<16x256xf32>
      %cst_86 = arith.constant dense<0.000000e+00> : vector<256xf32>
      %172 = vector.multi_reduction <add>, %171, %cst_86 [0] : vector<16x256xf32> to vector<256xf32>
      %173 = vector.shape_cast %172 : vector<256xf32> to vector<1x256xf32>
      %174 = vector.extract_strided_slice %88 {offsets = [0, 2], sizes = [16, 1], strides = [1, 1]} : vector<16x8xf32> to vector<16x1xf32>
      %175 = vector.extract_strided_slice %84 {offsets = [2, 0], sizes = [1, 256], strides = [1, 1]} : vector<8x256xf32> to vector<1x256xf32>
      %176 = vector.broadcast %174 : vector<16x1xf32> to vector<16x256xf32>
      %177 = vector.broadcast %175 : vector<1x256xf32> to vector<16x256xf32>
      %178 = arith.mulf %176, %177 : vector<16x256xf32>
      %c2_87 = arith.constant 2 : index
      %c0_88 = arith.constant 0 : index
      %c0_89 = arith.constant 0 : index
      %179 = vector.load %arg19[%c2_87, %c0_88, %c0_89] : memref<8x16x256xf32, #tpu.memory_space<vmem>>, vector<1x16x256xf32>
      %180 = vector.shape_cast %179 : vector<1x16x256xf32> to vector<16x256xf32>
      %181 = arith.mulf %168, %180 : vector<16x256xf32>
      %182 = arith.addf %181, %178 : vector<16x256xf32>
      %183 = vector.extract_strided_slice %89 {offsets = [0, 2], sizes = [16, 1], strides = [1, 1]} : vector<16x8xf32> to vector<16x1xf32>
      %184 = vector.broadcast %183 : vector<16x1xf32> to vector<16x256xf32>
      %185 = arith.mulf %184, %182 : vector<16x256xf32>
      %cst_90 = arith.constant dense<0.000000e+00> : vector<256xf32>
      %186 = vector.multi_reduction <add>, %185, %cst_90 [0] : vector<16x256xf32> to vector<256xf32>
      %187 = vector.shape_cast %186 : vector<256xf32> to vector<1x256xf32>
      %188 = vector.extract_strided_slice %88 {offsets = [0, 3], sizes = [16, 1], strides = [1, 1]} : vector<16x8xf32> to vector<16x1xf32>
      %189 = vector.extract_strided_slice %84 {offsets = [3, 0], sizes = [1, 256], strides = [1, 1]} : vector<8x256xf32> to vector<1x256xf32>
      %190 = vector.broadcast %188 : vector<16x1xf32> to vector<16x256xf32>
      %191 = vector.broadcast %189 : vector<1x256xf32> to vector<16x256xf32>
      %192 = arith.mulf %190, %191 : vector<16x256xf32>
      %c3_91 = arith.constant 3 : index
      %c0_92 = arith.constant 0 : index
      %c0_93 = arith.constant 0 : index
      %193 = vector.load %arg19[%c3_91, %c0_92, %c0_93] : memref<8x16x256xf32, #tpu.memory_space<vmem>>, vector<1x16x256xf32>
      %194 = vector.shape_cast %193 : vector<1x16x256xf32> to vector<16x256xf32>
      %195 = arith.mulf %182, %194 : vector<16x256xf32>
      %196 = arith.addf %195, %192 : vector<16x256xf32>
      %197 = vector.extract_strided_slice %89 {offsets = [0, 3], sizes = [16, 1], strides = [1, 1]} : vector<16x8xf32> to vector<16x1xf32>
      %198 = vector.broadcast %197 : vector<16x1xf32> to vector<16x256xf32>
      %199 = arith.mulf %198, %196 : vector<16x256xf32>
      %cst_94 = arith.constant dense<0.000000e+00> : vector<256xf32>
      %200 = vector.multi_reduction <add>, %199, %cst_94 [0] : vector<16x256xf32> to vector<256xf32>
      %201 = vector.shape_cast %200 : vector<256xf32> to vector<1x256xf32>
      %202 = vector.extract_strided_slice %88 {offsets = [0, 4], sizes = [16, 1], strides = [1, 1]} : vector<16x8xf32> to vector<16x1xf32>
      %203 = vector.extract_strided_slice %84 {offsets = [4, 0], sizes = [1, 256], strides = [1, 1]} : vector<8x256xf32> to vector<1x256xf32>
      %204 = vector.broadcast %202 : vector<16x1xf32> to vector<16x256xf32>
      %205 = vector.broadcast %203 : vector<1x256xf32> to vector<16x256xf32>
      %206 = arith.mulf %204, %205 : vector<16x256xf32>
      %c4_95 = arith.constant 4 : index
      %c0_96 = arith.constant 0 : index
      %c0_97 = arith.constant 0 : index
      %207 = vector.load %arg19[%c4_95, %c0_96, %c0_97] : memref<8x16x256xf32, #tpu.memory_space<vmem>>, vector<1x16x256xf32>
      %208 = vector.shape_cast %207 : vector<1x16x256xf32> to vector<16x256xf32>
      %209 = arith.mulf %196, %208 : vector<16x256xf32>
      %210 = arith.addf %209, %206 : vector<16x256xf32>
      %211 = vector.extract_strided_slice %89 {offsets = [0, 4], sizes = [16, 1], strides = [1, 1]} : vector<16x8xf32> to vector<16x1xf32>
      %212 = vector.broadcast %211 : vector<16x1xf32> to vector<16x256xf32>
      %213 = arith.mulf %212, %210 : vector<16x256xf32>
      %cst_98 = arith.constant dense<0.000000e+00> : vector<256xf32>
      %214 = vector.multi_reduction <add>, %213, %cst_98 [0] : vector<16x256xf32> to vector<256xf32>
      %215 = vector.shape_cast %214 : vector<256xf32> to vector<1x256xf32>
      %216 = vector.extract_strided_slice %88 {offsets = [0, 5], sizes = [16, 1], strides = [1, 1]} : vector<16x8xf32> to vector<16x1xf32>
      %217 = vector.extract_strided_slice %84 {offsets = [5, 0], sizes = [1, 256], strides = [1, 1]} : vector<8x256xf32> to vector<1x256xf32>
      %218 = vector.broadcast %216 : vector<16x1xf32> to vector<16x256xf32>
      %219 = vector.broadcast %217 : vector<1x256xf32> to vector<16x256xf32>
      %220 = arith.mulf %218, %219 : vector<16x256xf32>
      %c5_99 = arith.constant 5 : index
      %c0_100 = arith.constant 0 : index
      %c0_101 = arith.constant 0 : index
      %221 = vector.load %arg19[%c5_99, %c0_100, %c0_101] : memref<8x16x256xf32, #tpu.memory_space<vmem>>, vector<1x16x256xf32>
      %222 = vector.shape_cast %221 : vector<1x16x256xf32> to vector<16x256xf32>
      %223 = arith.mulf %210, %222 : vector<16x256xf32>
      %224 = arith.addf %223, %220 : vector<16x256xf32>
      %225 = vector.extract_strided_slice %89 {offsets = [0, 5], sizes = [16, 1], strides = [1, 1]} : vector<16x8xf32> to vector<16x1xf32>
      %226 = vector.broadcast %225 : vector<16x1xf32> to vector<16x256xf32>
      %227 = arith.mulf %226, %224 : vector<16x256xf32>
      %cst_102 = arith.constant dense<0.000000e+00> : vector<256xf32>
      %228 = vector.multi_reduction <add>, %227, %cst_102 [0] : vector<16x256xf32> to vector<256xf32>
      %229 = vector.shape_cast %228 : vector<256xf32> to vector<1x256xf32>
      %230 = vector.extract_strided_slice %88 {offsets = [0, 6], sizes = [16, 1], strides = [1, 1]} : vector<16x8xf32> to vector<16x1xf32>
      %231 = vector.extract_strided_slice %84 {offsets = [6, 0], sizes = [1, 256], strides = [1, 1]} : vector<8x256xf32> to vector<1x256xf32>
      %232 = vector.broadcast %230 : vector<16x1xf32> to vector<16x256xf32>
      %233 = vector.broadcast %231 : vector<1x256xf32> to vector<16x256xf32>
      %234 = arith.mulf %232, %233 : vector<16x256xf32>
      %c6_103 = arith.constant 6 : index
      %c0_104 = arith.constant 0 : index
      %c0_105 = arith.constant 0 : index
      %235 = vector.load %arg19[%c6_103, %c0_104, %c0_105] : memref<8x16x256xf32, #tpu.memory_space<vmem>>, vector<1x16x256xf32>
      %236 = vector.shape_cast %235 : vector<1x16x256xf32> to vector<16x256xf32>
      %237 = arith.mulf %224, %236 : vector<16x256xf32>
      %238 = arith.addf %237, %234 : vector<16x256xf32>
      %239 = vector.extract_strided_slice %89 {offsets = [0, 6], sizes = [16, 1], strides = [1, 1]} : vector<16x8xf32> to vector<16x1xf32>
      %240 = vector.broadcast %239 : vector<16x1xf32> to vector<16x256xf32>
      %241 = arith.mulf %240, %238 : vector<16x256xf32>
      %cst_106 = arith.constant dense<0.000000e+00> : vector<256xf32>
      %242 = vector.multi_reduction <add>, %241, %cst_106 [0] : vector<16x256xf32> to vector<256xf32>
      %243 = vector.shape_cast %242 : vector<256xf32> to vector<1x256xf32>
      %244 = vector.extract_strided_slice %88 {offsets = [0, 7], sizes = [16, 1], strides = [1, 1]} : vector<16x8xf32> to vector<16x1xf32>
      %245 = vector.extract_strided_slice %84 {offsets = [7, 0], sizes = [1, 256], strides = [1, 1]} : vector<8x256xf32> to vector<1x256xf32>
      %246 = vector.broadcast %244 : vector<16x1xf32> to vector<16x256xf32>
      %247 = vector.broadcast %245 : vector<1x256xf32> to vector<16x256xf32>
      %248 = arith.mulf %246, %247 : vector<16x256xf32>
      %c7_107 = arith.constant 7 : index
      %c0_108 = arith.constant 0 : index
      %c0_109 = arith.constant 0 : index
      %249 = vector.load %arg19[%c7_107, %c0_108, %c0_109] : memref<8x16x256xf32, #tpu.memory_space<vmem>>, vector<1x16x256xf32>
      %250 = vector.shape_cast %249 : vector<1x16x256xf32> to vector<16x256xf32>
      %251 = arith.mulf %238, %250 : vector<16x256xf32>
      %252 = arith.addf %251, %248 : vector<16x256xf32>
      %253 = vector.extract_strided_slice %89 {offsets = [0, 7], sizes = [16, 1], strides = [1, 1]} : vector<16x8xf32> to vector<16x1xf32>
      %254 = vector.broadcast %253 : vector<16x1xf32> to vector<16x256xf32>
      %255 = arith.mulf %254, %252 : vector<16x256xf32>
      %cst_110 = arith.constant dense<0.000000e+00> : vector<256xf32>
      %256 = vector.multi_reduction <add>, %255, %cst_110 [0] : vector<16x256xf32> to vector<256xf32>
      %257 = vector.shape_cast %256 : vector<256xf32> to vector<1x256xf32>
      %258 = tpu.concatenate %159, %173, %187, %201, %215, %229, %243, %257 in 0 : vector<1x256xf32>, vector<1x256xf32>, vector<1x256xf32>, vector<1x256xf32>, vector<1x256xf32>, vector<1x256xf32>, vector<1x256xf32>, vector<1x256xf32> -> vector<8x256xf32>
      %259 = arith.index_cast %79 : i32 to index
      %c0_111 = arith.constant 0 : index
      %260 = vector.load %arg17[%259, %c0_111] : memref<16x256xf32, #tpu.memory_space<vmem>>, vector<8x256xf32>
      tpu.vector_store %arg17[%259, %c0_111], %258 {strides = array<i32>} : memref<16x256xf32, #tpu.memory_space<vmem>>, vector<8x256xf32>,
      scf.yield %252 : vector<16x256xf32>
    }
    %c2_i32_39 = arith.constant 2 : i32
    %c0_40 = arith.constant 0 : index
    %c0_41 = arith.constant 0 : index
    %61 = vector.load %arg20[%c0_40, %c0_41] : memref<16x256xf32, #tpu.memory_space<vmem>>, vector<16x256xf32>
    tpu.vector_store %arg20[%c0_40, %c0_41], %60 {strides = array<i32>} : memref<16x256xf32, #tpu.memory_space<vmem>>, vector<16x256xf32>,
    %c0_42 = arith.constant 0 : index
    %c0_43 = arith.constant 0 : index
    %62 = vector.load %arg17[%c0_42, %c0_43] : memref<16x256xf32, #tpu.memory_space<vmem>>, vector<16x256xf32>
    %c0_44 = arith.constant 0 : index
    %c0_45 = arith.constant 0 : index
    %63 = vector.load %arg12[%c0_44, %c0_45] : memref<1x256xf32, #tpu.memory_space<vmem>>, vector<1x256xf32>
    %c0_46 = arith.constant 0 : index
    %c0_47 = arith.constant 0 : index
    %64 = vector.load %arg14[%c0_46, %c0_47] : memref<16x256xf32, #tpu.memory_space<vmem>>, vector<16x256xf32>
    %65 = vector.broadcast %63 : vector<1x256xf32> to vector<16x256xf32>
    %66 = arith.mulf %65, %64 : vector<16x256xf32>
    %67 = arith.addf %62, %66 : vector<16x256xf32>
    %c0_48 = arith.constant 0 : index
    %c0_49 = arith.constant 0 : index
    %68 = vector.load %arg18[%c0_48, %c0_49] : memref<16x256xf32, #tpu.memory_space<vmem>>, vector<16x256xf32>
    %69 = arith.mulf %67, %68 : vector<16x256xf32>
    %c0_50 = arith.constant 0 : index
    %c0_51 = arith.constant 0 : index
    %70 = vector.load %arg9[%c0_50, %c0_51] : memref<256x128xf32, #tpu.memory_space<vmem>>, vector<256x128xf32>
    %cst_52 = arith.constant dense<0.000000e+00> : vector<16x128xf32>
    %71 = tpu.matmul %69, %70, %cst_52 {dimension_numbers = #tpu.dot_dimension_numbers<[1], [0], [0], [1], [0, 0, 1, 1], [], []>} : vector<16x256xf32>, vector<256x128xf32>, vector<16x128xf32> -> vector<16x128xf32>
    %c0_53 = arith.constant 0 : index
    %c0_54 = arith.constant 0 : index
    %72 = vector.load %arg10[%c0_53, %c0_54] : memref<1x128xf32, #tpu.memory_space<vmem>>, vector<1x128xf32>
    %73 = vector.broadcast %72 : vector<1x128xf32> to vector<16x128xf32>
    %74 = arith.addf %71, %73 : vector<16x128xf32>
    %c0_55 = arith.constant 0 : index
    %c0_56 = arith.constant 0 : index
    %c0_57 = arith.constant 0 : index
    %75 = vector.load %arg13[%c0_55, %c0_56, %c0_57] : memref<1x16x128xf32, #tpu.memory_space<vmem>>, vector<1x16x128xf32>
    %76 = vector.shape_cast %75 : vector<1x16x128xf32> to vector<16x128xf32>
    %77 = vector.shape_cast %74 : vector<16x128xf32> to vector<1x16x128xf32>
    tpu.vector_store %arg13[%c0_55, %c0_56, %c0_57], %77 {strides = array<i32>} : memref<1x16x128xf32, #tpu.memory_space<vmem>>, vector<1x16x128xf32>,
    return
  }
  func.func @transform_0(%arg0: i32, %arg1: i32) -> (i32, i32, i32) {
    %c0_i32 = arith.constant 0 : i32
    %c0_i32_0 = arith.constant 0 : i32
    return %arg0, %arg1, %c0_i32 : i32, i32, i32
  }
  func.func @transform_1(%arg0: i32, %arg1: i32) -> (i32, i32) {
    %c0_i32 = arith.constant 0 : i32
    %c0_i32_0 = arith.constant 0 : i32
    %c0_i32_1 = arith.constant 0 : i32
    return %c0_i32, %c0_i32_0 : i32, i32
  }
  func.func @transform_2(%arg0: i32, %arg1: i32) -> (i32, i32) {
    %c0_i32 = arith.constant 0 : i32
    %c0_i32_0 = arith.constant 0 : i32
    %c0_i32_1 = arith.constant 0 : i32
    return %c0_i32, %c0_i32_0 : i32, i32
  }
  func.func @transform_3(%arg0: i32, %arg1: i32) -> (i32, i32) {
    %c0_i32 = arith.constant 0 : i32
    %c0_i32_0 = arith.constant 0 : i32
    %c0_i32_1 = arith.constant 0 : i32
    return %c0_i32, %c0_i32_0 : i32, i32
  }
  func.func @transform_4(%arg0: i32, %arg1: i32) -> (i32, i32) {
    %c0_i32 = arith.constant 0 : i32
    %c0_i32_0 = arith.constant 0 : i32
    %c0_i32_1 = arith.constant 0 : i32
    return %c0_i32, %c0_i32_0 : i32, i32
  }
  func.func @transform_5(%arg0: i32, %arg1: i32) -> (i32, i32) {
    %c0_i32 = arith.constant 0 : i32
    %c0_i32_0 = arith.constant 0 : i32
    %c0_i32_1 = arith.constant 0 : i32
    return %c0_i32, %c0_i32_0 : i32, i32
  }
  func.func @transform_6(%arg0: i32, %arg1: i32) -> (i32, i32) {
    %c0_i32 = arith.constant 0 : i32
    %c0_i32_0 = arith.constant 0 : i32
    %c0_i32_1 = arith.constant 0 : i32
    return %c0_i32, %c0_i32_0 : i32, i32
  }
  func.func @transform_7(%arg0: i32, %arg1: i32) -> (i32, i32) {
    %c0_i32 = arith.constant 0 : i32
    %c0_i32_0 = arith.constant 0 : i32
    %c0_i32_1 = arith.constant 0 : i32
    return %c0_i32, %c0_i32_0 : i32, i32
  }
  func.func @transform_8(%arg0: i32, %arg1: i32) -> (i32, i32) {
    %c0_i32 = arith.constant 0 : i32
    %c0_i32_0 = arith.constant 0 : i32
    %c0_i32_1 = arith.constant 0 : i32
    return %c0_i32, %c0_i32_0 : i32, i32
  }
  func.func @transform_9(%arg0: i32, %arg1: i32) -> (i32, i32) {
    %c0_i32 = arith.constant 0 : i32
    %c0_i32_0 = arith.constant 0 : i32
    %c0_i32_1 = arith.constant 0 : i32
    return %c0_i32, %c0_i32_0 : i32, i32
  }
  func.func @transform_10(%arg0: i32, %arg1: i32) -> (i32, i32) {
    %c0_i32 = arith.constant 0 : i32
    %c0_i32_0 = arith.constant 0 : i32
    %c0_i32_1 = arith.constant 0 : i32
    return %c0_i32, %c0_i32_0 : i32, i32
  }
  func.func @transform_11(%arg0: i32, %arg1: i32) -> (i32, i32, i32) {
    %c0_i32 = arith.constant 0 : i32
    %c0_i32_0 = arith.constant 0 : i32
    return %arg0, %arg1, %c0_i32 : i32, i32, i32
  }
}

</mosaic_0001>

<llo_original>
// kernel: tpu_custom_call.1
$region0: #{tpu_custom_call.1}
  #allocation0 [shape = 'u32[]', space=smem, size = 0x4, offset = 0x4, fixed_abs, tag = 'smem constant byte address 0x4 - core index']
  #allocation1 [shape = 'u32[144,128]{1,0:T(1,128)}', space=vmem, size = 0x12000, scoped, tag = 'internal scratch']
  #allocation2 [shape = 'f32[16,256]{1,0:T(8,128)}', space=vmem, size = 0x4000, scoped, tag = 'scratch operand']
  #allocation3 [shape = 'f32[16,256]{1,0:T(8,128)}', space=vmem, size = 0x4000, scoped, tag = 'scratch operand']
  #allocation4 [shape = 'f32[16,32]{1,0:T(8,128)}', space=vmem, size = 0x2000, scoped, tag = 'scratch operand']
  #allocation5 [shape = 'f32[16,256]{1,0:T(8,128)}', space=vmem, size = 0x4000, scoped, tag = 'scratch operand']
  #allocation6 [shape = 'f32[16,256]{1,0:T(8,128)}', space=vmem, size = 0x4000, scoped, tag = 'scratch operand']
  #allocation7 [shape = 'f32[8,16,256]{2,1,0:T(8,128)}', space=vmem, size = 0x20000, scoped, tag = 'scratch operand']
  #allocation8 [shape = 'f32[16,256]{1,0:T(8,128)}', space=vmem, size = 0x4000, scoped, tag = 'scratch operand']
  %s0 = inlined_call_operand.vmem [shape: f32[2,32,128], index: 0, kind: input, shape index: {}]
  %s1 = inlined_call_operand.hbm [shape: f32[128,512], index: 1, kind: input, shape index: {}]
  %s2 = inlined_call_operand.hbm [shape: f32[1,512], index: 2, kind: input, shape index: {}]
  %s3 = inlined_call_operand.vmem [shape: f32[256,32], index: 3, kind: input, shape index: {}]
  %s4 = inlined_call_operand.hbm [shape: f32[1,32], index: 4, kind: input, shape index: {}]
  %s5 = inlined_call_operand.hbm [shape: f32[256,256], index: 5, kind: input, shape index: {}]
  %s6 = inlined_call_operand.vmem [shape: f32[1,256], index: 6, kind: input, shape index: {}]
  %s7 = inlined_call_operand.vmem [shape: f32[256,128], index: 7, kind: input, shape index: {}]
  %s8 = inlined_call_operand.hbm [shape: f32[1,128], index: 8, kind: input, shape index: {}]
  %s9 = inlined_call_operand.vmem [shape: f32[16,256], index: 9, kind: input, shape index: {}]
  %s10 = inlined_call_operand.vmem [shape: f32[1,256], index: 10, kind: input, shape index: {}]
  %s11 = inlined_call_operand.hbm [shape: f32[2,32,128], index: 11, kind: output, shape index: {}]
  %s12 = sld [smem:[#allocation0]]
  $region108: #{tpu_custom_call.1} parent=0
    _
  %s14 = ssub.s32 1, %s12
  %s15 = scalar_select 0, %s14, %s12
  $region1: #{tpu_custom_call.1} parent=0
    #allocation9 [shape = 'u8[262144]{0}', space=vmem, size = 0x40000, scoped, tag = 'input window, operand 1, single buffered']
    #allocation10 [shape = 's32[2]{0}', space=sflag, size = 0x8, scoped, tag = 'scoped memory for tpu_custom_call.1']
    #allocation11 [shape = 's32[2]{0}', space=sflag, size = 0x8, scoped, tag = 'scoped memory for tpu_custom_call.1']
    #allocation12 [shape = 'u8[2048]{0}', space=vmem, size = 0x800, scoped, tag = 'input window, operand 2, single buffered']
    #allocation13 [shape = 's32[1]{0}', space=sflag, size = 0x4, scoped, tag = 'scoped memory for tpu_custom_call.1']
    #allocation14 [shape = 'u8[512]{0}', space=vmem, size = 0x400, scoped, tag = 'input window, operand 4, single buffered']
    #allocation15 [shape = 'u8[262144]{0}', space=vmem, size = 0x40000, scoped, tag = 'input window, operand 5, single buffered']
    #allocation16 [shape = 's32[1]{0}', space=sflag, size = 0x4, scoped, tag = 'scoped memory for tpu_custom_call.1']
    #allocation17 [shape = 'u8[512]{0}', space=vmem, size = 0x400, scoped, tag = 'input window, operand 8, single buffered']
    #allocation18 [shape = 'u8[16384]{0}', space=vmem, size = 0x4000, scoped, tag = 'output window, operand 0']
    %16 = vsyncpa [#allocation10], 0
    %17 = vsyncpa [#allocation13], 0
    %18 = vsyncpa [#allocation16], 0
    %19 = vsyncpa [#allocation11], 0
    %s20 = scalar_lea.sflag [#allocation11], 1
    %21 = vsyncpa %s20, 0
    loop: start=0, step=1, limit=6
    $region2: #{tpu_custom_call.1} parent=1 // loop_pre_header
      _
    $region3: #{tpu_custom_call.1} parent=1 // loop_header
      %s23 = sphi 0, %s27
      %p24 = scmp.ge.s32.totalorder %s23, 6
      %s30 = sphi 0, %s42
      %s31 = sphi 0, %s38
      %s32 = sphi 0, %s30
      %s33 = sphi 0, %s31
      %s34 = sphi 0, %s32
      %s35 = sphi 0, %s33
      %s47 = sphi 0, %s49
      %s50 = sphi 0, %s47
      %s51 = sphi 0, %s50
      %s67 = sphi 0, %s51
      %s71 = sphi 0, %s71
      %s73 = sphi 0, %s71
      %s74 = sphi 0, %s73
      %s88 = sphi 0, %s74
      %s92 = sphi 0, %s92
      %s94 = sphi 0, %s92
      %s95 = sphi 0, %s94
      %s109 = sphi 0, %s95
      %s113 = sphi 0, %s113
      %s115 = sphi 0, %s113
      %s116 = sphi 0, %s115
      %s130 = sphi 0, %s116
      %s134 = sphi 0, %s134
      %s136 = sphi 0, %s134
      %s137 = sphi 0, %s136
      %s151 = sphi 0, %s137
      %s155 = sphi 0, %s155
      %s157 = sphi 0, %s155
      %s158 = sphi 0, %s157
      %s172 = sphi 0, %s158
      %s176 = sphi 0, %s176
      %s178 = sphi 0, %s176
      %s179 = sphi 0, %s178
      %s193 = sphi 0, %s179
      %s197 = sphi 0, %s197
      %s199 = sphi 0, %s197
      %s200 = sphi 0, %s199
      %s214 = sphi 0, %s200
      %s218 = sphi 0, %s218
      %s220 = sphi 0, %s218
      %s221 = sphi 0, %s220
      %s235 = sphi 0, %s221
      %s239 = sphi 0, %s239
      %s241 = sphi 0, %s239
      %s242 = sphi 0, %s241
      %s256 = sphi 0, %s242
      %s260 = sphi 0, %s260
      %s262 = sphi 0, %s260
      %s263 = sphi 0, %s262
      %s277 = sphi 0, %s263
      %s285 = sphi 0, %s287
      %s288 = sphi 0, %s285
      %s289 = sphi 0, %s288
      %s305 = sphi 0, %s289
    $region4: #{tpu_custom_call.1} parent=1 // loop_header_branch
      %26 = sbr.rel (%p24) target = $region8
    $region5: #{tpu_custom_call.1} parent=1 // loop_body
      %s28 = ssub.s32 %s23, 1
      %s29 = ssub.s32 %s23, 2
      %s36 = sadd.s32 1, %s31
      %p37 = scmp.ge.s32.totalorder %s36, 2
      %s38 = scalar_select %p37, 0, %s36
      %s39 = sadd.s32 1, %s30
      %s40 = scalar_select %p37, %s39, %s30
      %p41 = scmp.ge.s32.totalorder %s40, 2
      %s42 = scalar_select %p41, 0, %s40
      %s43 = ssub.s32 %s30, %s42
      %s44 = ssub.s32 %s31, %s38
      %s45 = sor.u32 %s43, %s44
      %p46 = scmp.eq.s32.totalorder %s45, 0
      %s48 = sadd.s32 %s47, 1
      %s49 = scalar_select %p46, %s47, %s48
      %p52 = pneg %p46
      %p53 = scmp.eq.s32.totalorder %s23, 3
      %p54 = por %p52, %p53
      %p55 = scmp.ne.s32.totalorder %s47, %s50
      %p56 = scmp.eq.s32.totalorder %s23, 0
      %p57 = por %p55, %p56
      %p58 = scmp.ne.s32.totalorder %s47, %s50
      %p59 = scmp.eq.s32.totalorder %s28, 3
      %p60 = por %p58, %p59
      %p61 = scmp.ne.s32.totalorder %s50, %s51
      %p62 = scmp.eq.s32.totalorder %s28, 0
      %p63 = por %p61, %p62
      %p64 = scmp.ne.s32.totalorder %s50, %s51
      %p65 = scmp.eq.s32.totalorder %s29, 3
      %p66 = por %p64, %p65
      %p68 = scmp.ne.s32.totalorder %s51, %s67
      %p69 = scmp.eq.s32.totalorder %s29, 0
      %p70 = por %p68, %p69
      %s72 = sadd.s32 %s71, 1
      %p75 = scmp.eq.s32.totalorder %s23, 3
      %p76 = scmp.ne.s32.totalorder %s71, %s73
      %p77 = scmp.eq.s32.totalorder %s23, 0
      %p78 = por %p76, %p77
      %p79 = scmp.ne.s32.totalorder %s71, %s73
      %p80 = scmp.eq.s32.totalorder %s28, 3
      %p81 = por %p79, %p80
      %p82 = scmp.ne.s32.totalorder %s73, %s74
      %p83 = scmp.eq.s32.totalorder %s28, 0
      %p84 = por %p82, %p83
      %p85 = scmp.ne.s32.totalorder %s73, %s74
      %p86 = scmp.eq.s32.totalorder %s29, 3
      %p87 = por %p85, %p86
      %p89 = scmp.ne.s32.totalorder %s74, %s88
      %p90 = scmp.eq.s32.totalorder %s29, 0
      %p91 = por %p89, %p90
      %s93 = sadd.s32 %s92, 1
      %p96 = scmp.eq.s32.totalorder %s23, 3
      %p97 = scmp.ne.s32.totalorder %s92, %s94
      %p98 = scmp.eq.s32.totalorder %s23, 0
      %p99 = por %p97, %p98
      %p100 = scmp.ne.s32.totalorder %s92, %s94
      %p101 = scmp.eq.s32.totalorder %s28, 3
      %p102 = por %p100, %p101
      %p103 = scmp.ne.s32.totalorder %s94, %s95
      %p104 = scmp.eq.s32.totalorder %s28, 0
      %p105 = por %p103, %p104
      %p106 = scmp.ne.s32.totalorder %s94, %s95
      %p107 = scmp.eq.s32.totalorder %s29, 3
      %p108 = por %p106, %p107
      %p110 = scmp.ne.s32.totalorder %s95, %s109
      %p111 = scmp.eq.s32.totalorder %s29, 0
      %p112 = por %p110, %p111
      %s114 = sadd.s32 %s113, 1
      %p117 = scmp.eq.s32.totalorder %s23, 3
      %p118 = scmp.ne.s32.totalorder %s113, %s115
      %p119 = scmp.eq.s32.totalorder %s23, 0
      %p120 = por %p118, %p119
      %p121 = scmp.ne.s32.totalorder %s113, %s115
      %p122 = scmp.eq.s32.totalorder %s28, 3
      %p123 = por %p121, %p122
      %p124 = scmp.ne.s32.totalorder %s115, %s116
      %p125 = scmp.eq.s32.totalorder %s28, 0
      %p126 = por %p124, %p125
      %p127 = scmp.ne.s32.totalorder %s115, %s116
      %p128 = scmp.eq.s32.totalorder %s29, 3
      %p129 = por %p127, %p128
      %p131 = scmp.ne.s32.totalorder %s116, %s130
      %p132 = scmp.eq.s32.totalorder %s29, 0
      %p133 = por %p131, %p132
      %s135 = sadd.s32 %s134, 1
      %p138 = scmp.eq.s32.totalorder %s23, 3
      %p139 = scmp.ne.s32.totalorder %s134, %s136
      %p140 = scmp.eq.s32.totalorder %s23, 0
      %p141 = por %p139, %p140
      %p142 = scmp.ne.s32.totalorder %s134, %s136
      %p143 = scmp.eq.s32.totalorder %s28, 3
      %p144 = por %p142, %p143
      %p145 = scmp.ne.s32.totalorder %s136, %s137
      %p146 = scmp.eq.s32.totalorder %s28, 0
      %p147 = por %p145, %p146
      %p148 = scmp.ne.s32.totalorder %s136, %s137
      %p149 = scmp.eq.s32.totalorder %s29, 3
      %p150 = por %p148, %p149
      %p152 = scmp.ne.s32.totalorder %s137, %s151
      %p153 = scmp.eq.s32.totalorder %s29, 0
      %p154 = por %p152, %p153
      %s156 = sadd.s32 %s155, 1
      %p159 = scmp.eq.s32.totalorder %s23, 3
      %p160 = scmp.ne.s32.totalorder %s155, %s157
      %p161 = scmp.eq.s32.totalorder %s23, 0
      %p162 = por %p160, %p161
      %p163 = scmp.ne.s32.totalorder %s155, %s157
      %p164 = scmp.eq.s32.totalorder %s28, 3
      %p165 = por %p163, %p164
      %p166 = scmp.ne.s32.totalorder %s157, %s158
      %p167 = scmp.eq.s32.totalorder %s28, 0
      %p168 = por %p166, %p167
      %p169 = scmp.ne.s32.totalorder %s157, %s158
      %p170 = scmp.eq.s32.totalorder %s29, 3
      %p171 = por %p169, %p170
      %p173 = scmp.ne.s32.totalorder %s158, %s172
      %p174 = scmp.eq.s32.totalorder %s29, 0
      %p175 = por %p173, %p174
      %s177 = sadd.s32 %s176, 1
      %p180 = scmp.eq.s32.totalorder %s23, 3
      %p181 = scmp.ne.s32.totalorder %s176, %s178
      %p182 = scmp.eq.s32.totalorder %s23, 0
      %p183 = por %p181, %p182
      %p184 = scmp.ne.s32.totalorder %s176, %s178
      %p185 = scmp.eq.s32.totalorder %s28, 3
      %p186 = por %p184, %p185
      %p187 = scmp.ne.s32.totalorder %s178, %s179
      %p188 = scmp.eq.s32.totalorder %s28, 0
      %p189 = por %p187, %p188
      %p190 = scmp.ne.s32.totalorder %s178, %s179
      %p191 = scmp.eq.s32.totalorder %s29, 3
      %p192 = por %p190, %p191
      %p194 = scmp.ne.s32.totalorder %s179, %s193
      %p195 = scmp.eq.s32.totalorder %s29, 0
      %p196 = por %p194, %p195
      %s198 = sadd.s32 %s197, 1
      %p201 = scmp.eq.s32.totalorder %s23, 3
      %p202 = scmp.ne.s32.totalorder %s197, %s199
      %p203 = scmp.eq.s32.totalorder %s23, 0
      %p204 = por %p202, %p203
      %p205 = scmp.ne.s32.totalorder %s197, %s199
      %p206 = scmp.eq.s32.totalorder %s28, 3
      %p207 = por %p205, %p206
      %p208 = scmp.ne.s32.totalorder %s199, %s200
      %p209 = scmp.eq.s32.totalorder %s28, 0
      %p210 = por %p208, %p209
      %p211 = scmp.ne.s32.totalorder %s199, %s200
      %p212 = scmp.eq.s32.totalorder %s29, 3
      %p213 = por %p211, %p212
      %p215 = scmp.ne.s32.totalorder %s200, %s214
      %p216 = scmp.eq.s32.totalorder %s29, 0
      %p217 = por %p215, %p216
      %s219 = sadd.s32 %s218, 1
      %p222 = scmp.eq.s32.totalorder %s23, 3
      %p223 = scmp.ne.s32.totalorder %s218, %s220
      %p224 = scmp.eq.s32.totalorder %s23, 0
      %p225 = por %p223, %p224
      %p226 = scmp.ne.s32.totalorder %s218, %s220
      %p227 = scmp.eq.s32.totalorder %s28, 3
      %p228 = por %p226, %p227
      %p229 = scmp.ne.s32.totalorder %s220, %s221
      %p230 = scmp.eq.s32.totalorder %s28, 0
      %p231 = por %p229, %p230
      %p232 = scmp.ne.s32.totalorder %s220, %s221
      %p233 = scmp.eq.s32.totalorder %s29, 3
      %p234 = por %p232, %p233
      %p236 = scmp.ne.s32.totalorder %s221, %s235
      %p237 = scmp.eq.s32.totalorder %s29, 0
      %p238 = por %p236, %p237
      %s240 = sadd.s32 %s239, 1
      %p243 = scmp.eq.s32.totalorder %s23, 3
      %p244 = scmp.ne.s32.totalorder %s239, %s241
      %p245 = scmp.eq.s32.totalorder %s23, 0
      %p246 = por %p244, %p245
      %p247 = scmp.ne.s32.totalorder %s239, %s241
      %p248 = scmp.eq.s32.totalorder %s28, 3
      %p249 = por %p247, %p248
      %p250 = scmp.ne.s32.totalorder %s241, %s242
      %p251 = scmp.eq.s32.totalorder %s28, 0
      %p252 = por %p250, %p251
      %p253 = scmp.ne.s32.totalorder %s241, %s242
      %p254 = scmp.eq.s32.totalorder %s29, 3
      %p255 = por %p253, %p254
      %p257 = scmp.ne.s32.totalorder %s242, %s256
      %p258 = scmp.eq.s32.totalorder %s29, 0
      %p259 = por %p257, %p258
      %s261 = sadd.s32 %s260, 1
      %p264 = scmp.eq.s32.totalorder %s23, 3
      %p265 = scmp.ne.s32.totalorder %s260, %s262
      %p266 = scmp.eq.s32.totalorder %s23, 0
      %p267 = por %p265, %p266
      %p268 = scmp.ne.s32.totalorder %s260, %s262
      %p269 = scmp.eq.s32.totalorder %s28, 3
      %p270 = por %p268, %p269
      %p271 = scmp.ne.s32.totalorder %s262, %s263
      %p272 = scmp.eq.s32.totalorder %s28, 0
      %p273 = por %p271, %p272
      %p274 = scmp.ne.s32.totalorder %s262, %s263
      %p275 = scmp.eq.s32.totalorder %s29, 3
      %p276 = por %p274, %p275
      %p278 = scmp.ne.s32.totalorder %s263, %s277
      %p279 = scmp.eq.s32.totalorder %s29, 0
      %p280 = por %p278, %p279
      %s281 = ssub.s32 %s30, %s42
      %s282 = ssub.s32 %s31, %s38
      %s283 = sor.u32 %s281, %s282
      %p284 = scmp.eq.s32.totalorder %s283, 0
      %s286 = sadd.s32 %s285, 1
      %s287 = scalar_select %p284, %s285, %s286
      %p290 = pneg %p284
      %p291 = scmp.eq.s32.totalorder %s23, 3
      %p292 = por %p290, %p291
      %p293 = scmp.ne.s32.totalorder %s285, %s288
      %p294 = scmp.eq.s32.totalorder %s23, 0
      %p295 = por %p293, %p294
      %p296 = scmp.ne.s32.totalorder %s285, %s288
      %p297 = scmp.eq.s32.totalorder %s28, 3
      %p298 = por %p296, %p297
      %p299 = scmp.ne.s32.totalorder %s288, %s289
      %p300 = scmp.eq.s32.totalorder %s28, 0
      %p301 = por %p299, %p300
      %p302 = scmp.ne.s32.totalorder %s288, %s289
      %p303 = scmp.eq.s32.totalorder %s29, 3
      %p304 = por %p302, %p303
      %p306 = scmp.ne.s32.totalorder %s289, %s305
      %p307 = scmp.eq.s32.totalorder %s29, 0
      %p308 = por %p306, %p307
      %p309 = scmp.le.s32.totalorder 1, %s23
      %p310 = scmp.lt.s32.totalorder %s23, 5
      %p311 = pnand %p309, %p310
      %p312 = pneg %p311
      // Predicated region
      $region9: #{tpu_custom_call.1} parent=5 // pred_check
        _
      $region10: #{tpu_custom_call.1} parent=5 // pred_check_branch
        %314 = sbr.rel (%p311) target = $region12
      $region11: #{tpu_custom_call.1} parent=5 // pred_region
        %s315 = ssub.s32 %s23, 1
        // Predicated region
        $region13: #{tpu_custom_call.1} parent=11 // pred_check
          %p316 = pneg %p84
        $region14: #{tpu_custom_call.1} parent=11 // pred_check_branch
          %318 = sbr.rel (%p316) target = $region16
        $region15: #{tpu_custom_call.1} parent=11 // pred_region
          %s320 = ssub.s32 8192, 8192
          %321 = vsyncadd [#allocation10], %s320
          %s322 = sshll.u32 [#allocation9], 4
          %s323 = int_to_ptr.vmem [resolvable:$true] %s322
          %328 = dma.hbm_to_vmem [thread:$0]  %s1, 8192, %s323, [#allocation10], 512, 512, 32
        $region16: #{tpu_custom_call.1} parent=11 // pred_fallthru
          _
        // Predicated region
        $region17: #{tpu_custom_call.1} parent=11 // pred_check
          %p329 = pneg %p105
        $region18: #{tpu_custom_call.1} parent=11 // pred_check_branch
          %331 = sbr.rel (%p329) target = $region20
        $region19: #{tpu_custom_call.1} parent=11 // pred_region
          %s333 = ssub.s32 64, 64
          %334 = vsyncadd [#allocation13], %s333
          %s336 = sshll.u32 [#allocation12], 4
          %s337 = int_to_ptr.vmem [resolvable:$true] %s336
          %339 = dma.hbm_to_vmem [thread:$0]  %s2, 64, %s337, [#allocation13]
        $region20: #{tpu_custom_call.1} parent=11 // pred_fallthru
          _
        // Predicated region
        $region21: #{tpu_custom_call.1} parent=11 // pred_check
          %p340 = pneg %p126
        $region22: #{tpu_custom_call.1} parent=11 // pred_check_branch
          %342 = sbr.rel (%p340) target = $region24
        $region23: #{tpu_custom_call.1} parent=11 // pred_region
          _
        $region24: #{tpu_custom_call.1} parent=11 // pred_fallthru
          _
        // Predicated region
        $region25: #{tpu_custom_call.1} parent=11 // pred_check
          %p343 = pneg %p147
        $region26: #{tpu_custom_call.1} parent=11 // pred_check_branch
          %345 = sbr.rel (%p343) target = $region28
        $region27: #{tpu_custom_call.1} parent=11 // pred_region
          %s347 = ssub.s32 16, 16
          %348 = vsyncadd [#allocation13], %s347
          %s350 = sshll.u32 [#allocation14], 4
          %s351 = int_to_ptr.vmem [resolvable:$true] %s350
          %353 = dma.hbm_to_vmem [thread:$0]  %s4, 16, %s351, [#allocation13]
        $region28: #{tpu_custom_call.1} parent=11 // pred_fallthru
          _
        // Predicated region
        $region29: #{tpu_custom_call.1} parent=11 // pred_check
          %p354 = pneg %p168
        $region30: #{tpu_custom_call.1} parent=11 // pred_check_branch
          %356 = sbr.rel (%p354) target = $region32
        $region31: #{tpu_custom_call.1} parent=11 // pred_region
          %s358 = ssub.s32 8192, 8192
          %359 = vsyncadd [#allocation16], %s358
          %s360 = sshll.u32 [#allocation15], 4
          %s361 = int_to_ptr.vmem [resolvable:$true] %s360
          %366 = dma.hbm_to_vmem [thread:$0]  %s5, 8192, %s361, [#allocation16], 256, 256, 16
        $region32: #{tpu_custom_call.1} parent=11 // pred_fallthru
          _
        // Predicated region
        $region33: #{tpu_custom_call.1} parent=11 // pred_check
          %p367 = pneg %p189
        $region34: #{tpu_custom_call.1} parent=11 // pred_check_branch
          %369 = sbr.rel (%p367) target = $region36
        $region35: #{tpu_custom_call.1} parent=11 // pred_region
          _
        $region36: #{tpu_custom_call.1} parent=11 // pred_fallthru
          _
        // Predicated region
        $region37: #{tpu_custom_call.1} parent=11 // pred_check
          %p370 = pneg %p210
        $region38: #{tpu_custom_call.1} parent=11 // pred_check_branch
          %372 = sbr.rel (%p370) target = $region40
        $region39: #{tpu_custom_call.1} parent=11 // pred_region
          _
        $region40: #{tpu_custom_call.1} parent=11 // pred_fallthru
          _
        // Predicated region
        $region41: #{tpu_custom_call.1} parent=11 // pred_check
          %p373 = pneg %p231
        $region42: #{tpu_custom_call.1} parent=11 // pred_check_branch
          %375 = sbr.rel (%p373) target = $region44
        $region43: #{tpu_custom_call.1} parent=11 // pred_region
          %s377 = ssub.s32 16, 16
          %378 = vsyncadd [#allocation16], %s377
          %s380 = sshll.u32 [#allocation17], 4
          %s381 = int_to_ptr.vmem [resolvable:$true] %s380
          %383 = dma.hbm_to_vmem [thread:$0]  %s8, 16, %s381, [#allocation16]
        $region44: #{tpu_custom_call.1} parent=11 // pred_fallthru
          _
        // Predicated region
        $region45: #{tpu_custom_call.1} parent=11 // pred_check
          %p384 = pneg %p252
        $region46: #{tpu_custom_call.1} parent=11 // pred_check_branch
          %386 = sbr.rel (%p384) target = $region48
        $region47: #{tpu_custom_call.1} parent=11 // pred_region
          _
        $region48: #{tpu_custom_call.1} parent=11 // pred_fallthru
          _
        // Predicated region
        $region49: #{tpu_custom_call.1} parent=11 // pred_check
          %p387 = pneg %p273
        $region50: #{tpu_custom_call.1} parent=11 // pred_check_branch
          %389 = sbr.rel (%p387) target = $region52
        $region51: #{tpu_custom_call.1} parent=11 // pred_region
          _
        $region52: #{tpu_custom_call.1} parent=11 // pred_fallthru
          _
      $region12: #{tpu_custom_call.1} parent=5 // pred_fallthru
        _
      %p390 = scmp.lt.s32.totalorder %s23, 4
      // Predicated region
      $region53: #{tpu_custom_call.1} parent=5 // pred_check
        %p391 = pneg %p390
      $region54: #{tpu_custom_call.1} parent=5 // pred_check_branch
        %393 = sbr.rel (%p391) target = $region56
      $region55: #{tpu_custom_call.1} parent=5 // pred_region
        // Predicated region
        $region57: #{tpu_custom_call.1} parent=55 // pred_check
          %p394 = pneg %p57
        $region58: #{tpu_custom_call.1} parent=55 // pred_check_branch
          %396 = sbr.rel (%p394) target = $region60
        $region59: #{tpu_custom_call.1} parent=55 // pred_region
          %s397 = smul.u32 2, %s31
          %p398 = scmp.lt.s32.totalorder %s30, 1
          %s399 = scalar_select %p398, %s30, 1
          %p400 = scmp.lt.s32.totalorder %s397, 3
          %s401 = scalar_select %p400, %s397, 3
          %s402 = smul.addr %s399, 4
          %s403 = sadd.s32 %s401, %s402
          %s404 = smul.addr %s403, 8
          %s405 = scalar_lea.vmem %s0, %s404
          %s406 = smul.u32 2, %s31
        $region60: #{tpu_custom_call.1} parent=55 // pred_fallthru
          _
      $region56: #{tpu_custom_call.1} parent=5 // pred_fallthru
        _
      %p407 = scmp.le.s32.totalorder 1, %s23
      %p408 = scmp.lt.s32.totalorder %s23, 5
      %p409 = pnand %p407, %p408
      %p410 = pneg %p409
      // Predicated region
      $region61: #{tpu_custom_call.1} parent=5 // pred_check
        _
      $region62: #{tpu_custom_call.1} parent=5 // pred_check_branch
        %412 = sbr.rel (%p409) target = $region64
      $region63: #{tpu_custom_call.1} parent=5 // pred_region
        %s413 = ssub.s32 %s23, 1
        // Predicated region
        $region65: #{tpu_custom_call.1} parent=63 // pred_check
          %p414 = pneg %p84
        $region66: #{tpu_custom_call.1} parent=63 // pred_check_branch
          %416 = sbr.rel (%p414) target = $region68
        $region67: #{tpu_custom_call.1} parent=63 // pred_region
          %417 = dma.done [#allocation10], 8192
        $region68: #{tpu_custom_call.1} parent=63 // pred_fallthru
          _
        // Predicated region
        $region69: #{tpu_custom_call.1} parent=63 // pred_check
          %p418 = pneg %p105
        $region70: #{tpu_custom_call.1} parent=63 // pred_check_branch
          %420 = sbr.rel (%p418) target = $region72
        $region71: #{tpu_custom_call.1} parent=63 // pred_region
          %421 = dma.done [#allocation13], 64
        $region72: #{tpu_custom_call.1} parent=63 // pred_fallthru
          _
        // Predicated region
        $region73: #{tpu_custom_call.1} parent=63 // pred_check
          %p422 = pneg %p147
        $region74: #{tpu_custom_call.1} parent=63 // pred_check_branch
          %424 = sbr.rel (%p422) target = $region76
        $region75: #{tpu_custom_call.1} parent=63 // pred_region
          %425 = dma.done [#allocation13], 16
        $region76: #{tpu_custom_call.1} parent=63 // pred_fallthru
          _
        // Predicated region
        $region77: #{tpu_custom_call.1} parent=63 // pred_check
          %p426 = pneg %p168
        $region78: #{tpu_custom_call.1} parent=63 // pred_check_branch
          %428 = sbr.rel (%p426) target = $region80
        $region79: #{tpu_custom_call.1} parent=63 // pred_region
          %429 = dma.done [#allocation16], 8192
        $region80: #{tpu_custom_call.1} parent=63 // pred_fallthru
          _
        // Predicated region
        $region81: #{tpu_custom_call.1} parent=63 // pred_check
          %p430 = pneg %p231
        $region82: #{tpu_custom_call.1} parent=63 // pred_check_branch
          %432 = sbr.rel (%p430) target = $region84
        $region83: #{tpu_custom_call.1} parent=63 // pred_region
          %433 = dma.done [#allocation16], 16
        $region84: #{tpu_custom_call.1} parent=63 // pred_fallthru
          _
        %s434 = smul.u32 2, %s33
        %p435 = scmp.lt.s32.totalorder %s32, 1
        %s436 = scalar_select %p435, %s32, 1
        %p437 = scmp.lt.s32.totalorder %s434, 3
        %s438 = scalar_select %p437, %s434, 3
        %s439 = smul.addr %s436, 4
        %s440 = sadd.s32 %s438, %s439
        %s441 = smul.addr %s440, 8
        %s442 = scalar_lea.vmem %s0, %s441
        %p443 = pneg %p63
        %p444 = pneg %p60
        %p445 = pneg %p84
        %p446 = pneg %p81
        %p447 = pneg %p105
        %p448 = pneg %p102
        %p449 = pneg %p126
        %p450 = pneg %p123
        %p451 = pneg %p147
        %p452 = pneg %p144
        %p453 = pneg %p168
        %p454 = pneg %p165
        %p455 = pneg %p189
        %p456 = pneg %p186
        %p457 = pneg %p210
        %p458 = pneg %p207
        %p459 = pneg %p231
        %p460 = pneg %p228
        %p461 = pneg %p252
        %p462 = pneg %p249
        %p463 = pneg %p273
        %p464 = pneg %p270
        %p465 = pneg %p301
        %p466 = pneg %p298
        %s467 = sand.u32 %s288, 1
        %s468 = scalar_lea.sflag [#allocation11], %s467
        %s469 = sand.u32 %s288, 1
        %s470 = smul.addr %s469, 16
        %s471 = scalar_lea.vmem [#allocation18], %s470
        %s472 = smul.u32 2, %s33
        %p473 = scmp.lt.s32.totalorder %s32, 1
        %s474 = scalar_select %p473, %s32, 1
        %p475 = scmp.lt.s32.totalorder %s472, 3
        %s476 = scalar_select %p475, %s472, 3
        %s477 = smul.addr %s474, 4
        %s478 = sadd.s32 %s476, %s477
        %s479 = smul.addr %s478, 8
        %s480 = scalar_lea.vmem %s0, %s479
        %s481 = smul.u32 2, %s33
        %s482 = smul.u32 2, %s33
        %v483 = vld [vmem:[%s480] sm:$0xff]
        %v484 = vld [vmem:[%s480 + $0x8] sm:$0xff]
        %v485 = vld [vmem:[#allocation9] sm:$0xff]
        %v486 = vld [vmem:[#allocation9 + $0x8] sm:$0xff]
        %v487 = vld [vmem:[#allocation9 + $0x10] sm:$0xff]
        %v488 = vld [vmem:[#allocation9 + $0x18] sm:$0xff]
        %v489 = vld [vmem:[#allocation9 + $0x20] sm:$0xff]
        %v490 = vld [vmem:[#allocation9 + $0x28] sm:$0xff]
        %v491 = vld [vmem:[#allocation9 + $0x30] sm:$0xff]
        %v492 = vld [vmem:[#allocation9 + $0x38] sm:$0xff]
        %v493 = vld [vmem:[#allocation9 + $0x40] sm:$0xff]
        %v494 = vld [vmem:[#allocation9 + $0x48] sm:$0xff]
        %v495 = vld [vmem:[#allocation9 + $0x50] sm:$0xff]
        %v496 = vld [vmem:[#allocation9 + $0x58] sm:$0xff]
        %v497 = vld [vmem:[#allocation9 + $0x60] sm:$0xff]
        %v498 = vld [vmem:[#allocation9 + $0x68] sm:$0xff]
        %v499 = vld [vmem:[#allocation9 + $0x70] sm:$0xff]
        %v500 = vld [vmem:[#allocation9 + $0x78] sm:$0xff]
        %v501 = vld [vmem:[#allocation9 + $0x80] sm:$0xff]
        %v502 = vld [vmem:[#allocation9 + $0x88] sm:$0xff]
        %v503 = vld [vmem:[#allocation9 + $0x90] sm:$0xff]
        %v504 = vld [vmem:[#allocation9 + $0x98] sm:$0xff]
        %v505 = vld [vmem:[#allocation9 + $0xa0] sm:$0xff]
        %v506 = vld [vmem:[#allocation9 + $0xa8] sm:$0xff]
        %v507 = vld [vmem:[#allocation9 + $0xb0] sm:$0xff]
        %v508 = vld [vmem:[#allocation9 + $0xb8] sm:$0xff]
        %v509 = vld [vmem:[#allocation9 + $0xc0] sm:$0xff]
        %v510 = vld [vmem:[#allocation9 + $0xc8] sm:$0xff]
        %v511 = vld [vmem:[#allocation9 + $0xd0] sm:$0xff]
        %v512 = vld [vmem:[#allocation9 + $0xd8] sm:$0xff]
        %v513 = vld [vmem:[#allocation9 + $0xe0] sm:$0xff]
        %v514 = vld [vmem:[#allocation9 + $0xe8] sm:$0xff]
        %v515 = vld [vmem:[#allocation9 + $0xf0] sm:$0xff]
        %v516 = vld [vmem:[#allocation9 + $0xf8] sm:$0xff]
        %v517 = vld [vmem:[#allocation9 + $0x100] sm:$0xff]
        %v518 = vld [vmem:[#allocation9 + $0x108] sm:$0xff]
        %v519 = vld [vmem:[#allocation9 + $0x110] sm:$0xff]
        %v520 = vld [vmem:[#allocation9 + $0x118] sm:$0xff]
        %v521 = vld [vmem:[#allocation9 + $0x120] sm:$0xff]
        %v522 = vld [vmem:[#allocation9 + $0x128] sm:$0xff]
        %v523 = vld [vmem:[#allocation9 + $0x130] sm:$0xff]
        %v524 = vld [vmem:[#allocation9 + $0x138] sm:$0xff]
        %v525 = vld [vmem:[#allocation9 + $0x140] sm:$0xff]
        %v526 = vld [vmem:[#allocation9 + $0x148] sm:$0xff]
        %v527 = vld [vmem:[#allocation9 + $0x150] sm:$0xff]
        %v528 = vld [vmem:[#allocation9 + $0x158] sm:$0xff]
        %v529 = vld [vmem:[#allocation9 + $0x160] sm:$0xff]
        %v530 = vld [vmem:[#allocation9 + $0x168] sm:$0xff]
        %v531 = vld [vmem:[#allocation9 + $0x170] sm:$0xff]
        %v532 = vld [vmem:[#allocation9 + $0x178] sm:$0xff]
        %v533 = vld [vmem:[#allocation9 + $0x180] sm:$0xff]
        %v534 = vld [vmem:[#allocation9 + $0x188] sm:$0xff]
        %v535 = vld [vmem:[#allocation9 + $0x190] sm:$0xff]
        %v536 = vld [vmem:[#allocation9 + $0x198] sm:$0xff]
        %v537 = vld [vmem:[#allocation9 + $0x1a0] sm:$0xff]
        %v538 = vld [vmem:[#allocation9 + $0x1a8] sm:$0xff]
        %v539 = vld [vmem:[#allocation9 + $0x1b0] sm:$0xff]
        %v540 = vld [vmem:[#allocation9 + $0x1b8] sm:$0xff]
        %v541 = vld [vmem:[#allocation9 + $0x1c0] sm:$0xff]
        %v542 = vld [vmem:[#allocation9 + $0x1c8] sm:$0xff]
        %v543 = vld [vmem:[#allocation9 + $0x1d0] sm:$0xff]
        %v544 = vld [vmem:[#allocation9 + $0x1d8] sm:$0xff]
        %v545 = vld [vmem:[#allocation9 + $0x1e0] sm:$0xff]
        %v546 = vld [vmem:[#allocation9 + $0x1e8] sm:$0xff]
        %v547 = vld [vmem:[#allocation9 + $0x1f0] sm:$0xff]
        %v548 = vld [vmem:[#allocation9 + $0x1f8] sm:$0xff]
        %v549 = vld [vmem:[#allocation12] sm:$0xf]
        %v551 = vlaneseq
        %v552 = vshrl.u32 %v551, 7
        %v553 = vsub.s32 0, %v552
        %v554 = vrot.slane %v549, %v553
        %v555 = vlaneseq
        %v556 = vshrl.u32 %v555, 7
        %v557 = vsub.s32 1, %v556
        %v558 = vrot.slane %v549, %v557
        %v559 = vlaneseq
        %v560 = vshrl.u32 %v559, 7
        %v561 = vsub.s32 2, %v560
        %v562 = vrot.slane %v549, %v561
        %v563 = vlaneseq
        %v564 = vshrl.u32 %v563, 7
        %v565 = vsub.s32 3, %v564
        %v566 = vrot.slane %v549, %v565
        %571 = vmatprep.subr.mxu0 %v486
        %572 = vmatpush1.msra.mxu0 %v485
        %573 = vmatprep.subr.mxu0 %v490
        %574 = vmatpush1.msra.mxu0 %v489
        %575 = vmatprep.subr.mxu0 %v494
        %576 = vmatpush1.msra.mxu0 %v493
        %577 = vmatprep.subr.mxu0 %v498
        %578 = vmatpush1.msra.mxu0 %v497
        %579 = vmatprep.subr.mxu0 %v502
        %580 = vmatpush1.msra.mxu0 %v501
        %581 = vmatprep.subr.mxu0 %v506
        %582 = vmatpush1.msra.mxu0 %v505
        %583 = vmatprep.subr.mxu0 %v510
        %584 = vmatpush1.msra.mxu0 %v509
        %585 = vmatprep.subr.mxu0 %v514
        %586 = vmatpush1.msra.mxu0 %v513
        %587 = vmatprep.subr.mxu0 %v518
        %588 = vmatpush1.msra.mxu0 %v517
        %589 = vmatprep.subr.mxu0 %v522
        %590 = vmatpush1.msra.mxu0 %v521
        %591 = vmatprep.subr.mxu0 %v526
        %592 = vmatpush1.msra.mxu0 %v525
        %593 = vmatprep.subr.mxu0 %v530
        %594 = vmatpush1.msra.mxu0 %v529
        %595 = vmatprep.subr.mxu0 %v534
        %596 = vmatpush1.msra.mxu0 %v533
        %597 = vmatprep.subr.mxu0 %v538
        %598 = vmatpush1.msra.mxu0 %v537
        %599 = vmatprep.subr.mxu0 %v542
        %600 = vmatpush1.msra.mxu0 %v541
        %601 = vmatprep.subr.mxu0 %v546
        %602 = vmatpush1.msra.mxu0 %v545
        %603 = vmatprep.subr.mxu0 0.0
        %604 = vmatpush1.msra.mxu0 0.0
        %605 = vmatprep.subr.mxu0 0.0
        %606 = vmatpush1.msra.mxu0 0.0
        %607 = vmatprep.subr.mxu0 0.0
        %608 = vmatpush1.msra.mxu0 0.0
        %609 = vmatprep.subr.mxu0 0.0
        %610 = vmatpush1.msra.mxu0 0.0
        %611 = vmatprep.subr.mxu0 0.0
        %612 = vmatpush1.msra.mxu0 0.0
        %613 = vmatprep.subr.mxu0 0.0
        %614 = vmatpush1.msra.mxu0 0.0
        %615 = vmatprep.subr.mxu0 0.0
        %616 = vmatpush1.msra.mxu0 0.0
        %617 = vmatprep.subr.mxu0 0.0
        %618 = vmatpush1.msra.mxu0 0.0
        %619 = vmatprep.subr.mxu0 0.0
        %620 = vmatpush1.msra.mxu0 0.0
        %621 = vmatprep.subr.mxu0 0.0
        %622 = vmatpush1.msra.mxu0 0.0
        %623 = vmatprep.subr.mxu0 0.0
        %624 = vmatpush1.msra.mxu0 0.0
        %625 = vmatprep.subr.mxu0 0.0
        %626 = vmatpush1.msra.mxu0 0.0
        %627 = vmatprep.subr.mxu0 0.0
        %628 = vmatpush1.msra.mxu0 0.0
        %629 = vmatprep.subr.mxu0 0.0
        %630 = vmatpush1.msra.mxu0 0.0
        %631 = vmatprep.subr.mxu0 0.0
        %632 = vmatpush1.msra.mxu0 0.0
        %633 = vmatprep.subr.mxu0 0.0
        %634 = vmatpush1.msra.mxu0 0.0
        %635 = vmatprep.mubr.f32.mxu0 0.0
        %636 = vmatmul.mubr.f32.gmra.mrb[0].mxu0 %v483
        %v637 = vpop.f32.mrb[0].mxu0
        %v638 = vadd.f32 %v554, %v637
        %v639 = vpop.f32.mrb[0].mxu0
        %v640 = vadd.f32 %v558, %v639
        %641 = vmatprep.mubr.f32.mxu0 0.0
        %642 = vmatmul.mubr.f32.gmra.mrb[0].mxu0 %v484
        %v643 = vpop.f32.mrb[0].mxu0
        %v644 = vadd.f32 %v554, %v643
        %v645 = vpop.f32.mrb[0].mxu0
        %v646 = vadd.f32 %v558, %v645
        %647 = vdwg.mxu0
        %648 = vmatprep.subr.mxu0 %v488
        %649 = vmatpush1.msra.mxu0 %v487
        %650 = vmatprep.subr.mxu0 %v492
        %651 = vmatpush1.msra.mxu0 %v491
        %652 = vmatprep.subr.mxu0 %v496
        %653 = vmatpush1.msra.mxu0 %v495
        %654 = vmatprep.subr.mxu0 %v500
        %655 = vmatpush1.msra.mxu0 %v499
        %656 = vmatprep.subr.mxu0 %v504
        %657 = vmatpush1.msra.mxu0 %v503
        %658 = vmatprep.subr.mxu0 %v508
        %659 = vmatpush1.msra.mxu0 %v507
        %660 = vmatprep.subr.mxu0 %v512
        %661 = vmatpush1.msra.mxu0 %v511
        %662 = vmatprep.subr.mxu0 %v516
        %663 = vmatpush1.msra.mxu0 %v515
        %664 = vmatprep.subr.mxu0 %v520
        %665 = vmatpush1.msra.mxu0 %v519
        %666 = vmatprep.subr.mxu0 %v524
        %667 = vmatpush1.msra.mxu0 %v523
        %668 = vmatprep.subr.mxu0 %v528
        %669 = vmatpush1.msra.mxu0 %v527
        %670 = vmatprep.subr.mxu0 %v532
        %671 = vmatpush1.msra.mxu0 %v531
        %672 = vmatprep.subr.mxu0 %v536
        %673 = vmatpush1.msra.mxu0 %v535
        %674 = vmatprep.subr.mxu0 %v540
        %675 = vmatpush1.msra.mxu0 %v539
        %676 = vmatprep.subr.mxu0 %v544
        %677 = vmatpush1.msra.mxu0 %v543
        %678 = vmatprep.subr.mxu0 %v548
        %679 = vmatpush1.msra.mxu0 %v547
        %680 = vmatprep.subr.mxu0 0.0
        %681 = vmatpush1.msra.mxu0 0.0
        %682 = vmatprep.subr.mxu0 0.0
        %683 = vmatpush1.msra.mxu0 0.0
        %684 = vmatprep.subr.mxu0 0.0
        %685 = vmatpush1.msra.mxu0 0.0
        %686 = vmatprep.subr.mxu0 0.0
        %687 = vmatpush1.msra.mxu0 0.0
        %688 = vmatprep.subr.mxu0 0.0
        %689 = vmatpush1.msra.mxu0 0.0
        %690 = vmatprep.subr.mxu0 0.0
        %691 = vmatpush1.msra.mxu0 0.0
        %692 = vmatprep.subr.mxu0 0.0
        %693 = vmatpush1.msra.mxu0 0.0
        %694 = vmatprep.subr.mxu0 0.0
        %695 = vmatpush1.msra.mxu0 0.0
        %696 = vmatprep.subr.mxu0 0.0
        %697 = vmatpush1.msra.mxu0 0.0
        %698 = vmatprep.subr.mxu0 0.0
        %699 = vmatpush1.msra.mxu0 0.0
        %700 = vmatprep.subr.mxu0 0.0
        %701 = vmatpush1.msra.mxu0 0.0
        %702 = vmatprep.subr.mxu0 0.0
        %703 = vmatpush1.msra.mxu0 0.0
        %704 = vmatprep.subr.mxu0 0.0
        %705 = vmatpush1.msra.mxu0 0.0
        %706 = vmatprep.subr.mxu0 0.0
        %707 = vmatpush1.msra.mxu0 0.0
        %708 = vmatprep.subr.mxu0 0.0
        %709 = vmatpush1.msra.mxu0 0.0
        %710 = vmatprep.subr.mxu0 0.0
        %711 = vmatpush1.msra.mxu0 0.0
        %712 = vmatprep.mubr.f32.mxu0 0.0
        %713 = vmatmul.mubr.f32.gmra.mrb[0].mxu0 %v483
        %v714 = vpop.f32.mrb[0].mxu0
        %v715 = vadd.f32 %v562, %v714
        %v716 = vpop.f32.mrb[0].mxu0
        %v717 = vadd.f32 %v566, %v716
        %718 = vmatprep.mubr.f32.mxu0 0.0
        %719 = vmatmul.mubr.f32.gmra.mrb[0].mxu0 %v484
        %v720 = vpop.f32.mrb[0].mxu0
        %v721 = vadd.f32 %v562, %v720
        %v722 = vpop.f32.mrb[0].mxu0
        %v723 = vadd.f32 %v566, %v722
        %724 = vdwg.mxu0
        %v725 = vmul.f32 %v715, 0.5
        %v726 = vmul.f32 %v717, 0.5
        %v727 = vmul.f32 %v721, 0.5
        %v728 = vmul.f32 %v723, 0.5
        %v729 = vtanh.pop %v725
        %v730 = vtanh.pop %v726
        %v731 = vtanh.pop %v727
        %v732 = vtanh.pop %v728
        %v733 = vadd.f32 %v729, 1.0
        %v734 = vadd.f32 %v730, 1.0
        %v735 = vadd.f32 %v731, 1.0
        %v736 = vadd.f32 %v732, 1.0
        %v737 = vmul.f32 %v733, 0.5
        %v738 = vmul.f32 %v734, 0.5
        %v739 = vmul.f32 %v735, 0.5
        %v740 = vmul.f32 %v736, 0.5
        %v741 = vmul.f32 %v715, %v737
        %v742 = vmul.f32 %v717, %v738
        %v743 = vmul.f32 %v721, %v739
        %v744 = vmul.f32 %v723, %v740
        %745 = vst [vmem:[#allocation6] sm:$0xff] %v741
        %746 = vst [vmem:[#allocation6 + $0x8] sm:$0xff] %v742
        %747 = vst [vmem:[#allocation6 + $0x10] sm:$0xff] %v743
        %748 = vst [vmem:[#allocation6 + $0x18] sm:$0xff] %v744
        %v749 = vmul.f32 %v638, 0.5
        %v750 = vmul.f32 %v640, 0.5
        %v751 = vmul.f32 %v644, 0.5
        %v752 = vmul.f32 %v646, 0.5
        %v753 = vtanh.pop %v749
        %v754 = vtanh.pop %v750
        %v755 = vtanh.pop %v751
        %v756 = vtanh.pop %v752
        %v757 = vadd.f32 %v753, 1.0
        %v758 = vadd.f32 %v754, 1.0
        %v759 = vadd.f32 %v755, 1.0
        %v760 = vadd.f32 %v756, 1.0
        %v761 = vmul.f32 %v757, 0.5
        %v762 = vmul.f32 %v758, 0.5
        %v763 = vmul.f32 %v759, 0.5
        %v764 = vmul.f32 %v760, 0.5
        %v765 = vmul.f32 %v638, %v761
        %v766 = vmul.f32 %v640, %v762
        %v767 = vmul.f32 %v644, %v763
        %v768 = vmul.f32 %v646, %v764
        %769 = vst [vmem:[#allocation2] sm:$0xff] %v765
        %770 = vst [vmem:[#allocation2 + $0x8] sm:$0xff] %v766
        %771 = vst [vmem:[#allocation2 + $0x10] sm:$0xff] %v767
        %772 = vst [vmem:[#allocation2 + $0x18] sm:$0xff] %v768
        %v773 = vld [vmem:[%s3] sm:$0xff]
        %v774 = vld [vmem:[%s3 + $0x8] sm:$0xff]
        %v775 = vld [vmem:[%s3 + $0x10] sm:$0xff]
        %v776 = vld [vmem:[%s3 + $0x18] sm:$0xff]
        %v777 = vld [vmem:[%s3 + $0x20] sm:$0xff]
        %v778 = vld [vmem:[%s3 + $0x28] sm:$0xff]
        %v779 = vld [vmem:[%s3 + $0x30] sm:$0xff]
        %v780 = vld [vmem:[%s3 + $0x38] sm:$0xff]
        %v781 = vld [vmem:[%s3 + $0x40] sm:$0xff]
        %v782 = vld [vmem:[%s3 + $0x48] sm:$0xff]
        %v783 = vld [vmem:[%s3 + $0x50] sm:$0xff]
        %v784 = vld [vmem:[%s3 + $0x58] sm:$0xff]
        %v785 = vld [vmem:[%s3 + $0x60] sm:$0xff]
        %v786 = vld [vmem:[%s3 + $0x68] sm:$0xff]
        %v787 = vld [vmem:[%s3 + $0x70] sm:$0xff]
        %v788 = vld [vmem:[%s3 + $0x78] sm:$0xff]
        %v789 = vld [vmem:[%s3 + $0x80] sm:$0xff]
        %v790 = vld [vmem:[%s3 + $0x88] sm:$0xff]
        %v791 = vld [vmem:[%s3 + $0x90] sm:$0xff]
        %v792 = vld [vmem:[%s3 + $0x98] sm:$0xff]
        %v793 = vld [vmem:[%s3 + $0xa0] sm:$0xff]
        %v794 = vld [vmem:[%s3 + $0xa8] sm:$0xff]
        %v795 = vld [vmem:[%s3 + $0xb0] sm:$0xff]
        %v796 = vld [vmem:[%s3 + $0xb8] sm:$0xff]
        %v797 = vld [vmem:[%s3 + $0xc0] sm:$0xff]
        %v798 = vld [vmem:[%s3 + $0xc8] sm:$0xff]
        %v799 = vld [vmem:[%s3 + $0xd0] sm:$0xff]
        %v800 = vld [vmem:[%s3 + $0xd8] sm:$0xff]
        %v801 = vld [vmem:[%s3 + $0xe0] sm:$0xff]
        %v802 = vld [vmem:[%s3 + $0xe8] sm:$0xff]
        %v803 = vld [vmem:[%s3 + $0xf0] sm:$0xff]
        %v804 = vld [vmem:[%s3 + $0xf8] sm:$0xff]
        %v805 = vld [vmem:[#allocation14] sm:$0x1]
        %v807 = vlaneseq
        %v808 = vshrl.u32 %v807, 7
        %v809 = vsub.s32 0, %v808
        %v810 = vrot.slane %v805, %v809
        %812 = vmatprep.subr.mxu0 0.0
        %813 = vmatpush1.msra.mxu0 %v773
        %814 = vmatprep.subr.mxu0 0.0
        %815 = vmatpush1.msra.mxu0 %v774
        %816 = vmatprep.subr.mxu0 0.0
        %817 = vmatpush1.msra.mxu0 %v775
        %818 = vmatprep.subr.mxu0 0.0
        %819 = vmatpush1.msra.mxu0 %v776
        %820 = vmatprep.subr.mxu0 0.0
        %821 = vmatpush1.msra.mxu0 %v777
        %822 = vmatprep.subr.mxu0 0.0
        %823 = vmatpush1.msra.mxu0 %v778
        %824 = vmatprep.subr.mxu0 0.0
        %825 = vmatpush1.msra.mxu0 %v779
        %826 = vmatprep.subr.mxu0 0.0
        %827 = vmatpush1.msra.mxu0 %v780
        %828 = vmatprep.subr.mxu0 0.0
        %829 = vmatpush1.msra.mxu0 %v781
        %830 = vmatprep.subr.mxu0 0.0
        %831 = vmatpush1.msra.mxu0 %v782
        %832 = vmatprep.subr.mxu0 0.0
        %833 = vmatpush1.msra.mxu0 %v783
        %834 = vmatprep.subr.mxu0 0.0
        %835 = vmatpush1.msra.mxu0 %v784
        %836 = vmatprep.subr.mxu0 0.0
        %837 = vmatpush1.msra.mxu0 %v785
        %838 = vmatprep.subr.mxu0 0.0
        %839 = vmatpush1.msra.mxu0 %v786
        %840 = vmatprep.subr.mxu0 0.0
        %841 = vmatpush1.msra.mxu0 %v787
        %842 = vmatprep.subr.mxu0 0.0
        %843 = vmatpush1.msra.mxu0 %v788
        %844 = vmatprep.subr.mxu0 0.0
        %845 = vmatpush1.msra.mxu0 %v789
        %846 = vmatprep.subr.mxu0 0.0
        %847 = vmatpush1.msra.mxu0 %v790
        %848 = vmatprep.subr.mxu0 0.0
        %849 = vmatpush1.msra.mxu0 %v791
        %850 = vmatprep.subr.mxu0 0.0
        %851 = vmatpush1.msra.mxu0 %v792
        %852 = vmatprep.subr.mxu0 0.0
        %853 = vmatpush1.msra.mxu0 %v793
        %854 = vmatprep.subr.mxu0 0.0
        %855 = vmatpush1.msra.mxu0 %v794
        %856 = vmatprep.subr.mxu0 0.0
        %857 = vmatpush1.msra.mxu0 %v795
        %858 = vmatprep.subr.mxu0 0.0
        %859 = vmatpush1.msra.mxu0 %v796
        %860 = vmatprep.subr.mxu0 0.0
        %861 = vmatpush1.msra.mxu0 %v797
        %862 = vmatprep.subr.mxu0 0.0
        %863 = vmatpush1.msra.mxu0 %v798
        %864 = vmatprep.subr.mxu0 0.0
        %865 = vmatpush1.msra.mxu0 %v799
        %866 = vmatprep.subr.mxu0 0.0
        %867 = vmatpush1.msra.mxu0 %v800
        %868 = vmatprep.subr.mxu0 0.0
        %869 = vmatpush1.msra.mxu0 %v801
        %870 = vmatprep.subr.mxu0 0.0
        %871 = vmatpush1.msra.mxu0 %v802
        %872 = vmatprep.subr.mxu0 0.0
        %873 = vmatpush1.msra.mxu0 %v803
        %874 = vmatprep.subr.mxu0 0.0
        %875 = vmatpush1.msra.mxu0 %v804
        %876 = vmatprep.mubr.f32.mxu0 %v766
        %877 = vmatmul.mubr.f32.gmra.mrb[0].mxu0 %v765
        %v878 = vpop.f32.mrb[0].mxu0
        %v879 = vadd.f32 %v810, %v878
        %v880 = vpop.f32.mrb[0].mxu0
        %881 = vmatprep.mubr.f32.mxu0 %v768
        %882 = vmatmul.mubr.f32.gmra.mrb[0].mxu0 %v767
        %v883 = vpop.f32.mrb[0].mxu0
        %v884 = vadd.f32 %v810, %v883
        %v885 = vpop.f32.mrb[0].mxu0
        %886 = vdwg.mxu0
        %vm887 = vcmask 261120
        %888 = vst.msk [vmem:[#allocation4] sm:$0xff] %vm887, %v879
        %889 = vst.msk [vmem:[#allocation4 + $0x8] sm:$0xff] %vm887, %v884
        %v890 = vld [vmem:[#allocation15] sm:$0xff]
        %v891 = vld [vmem:[#allocation15 + $0x8] sm:$0xff]
        %v892 = vld [vmem:[#allocation15 + $0x10] sm:$0xff]
        %v893 = vld [vmem:[#allocation15 + $0x18] sm:$0xff]
        %v894 = vld [vmem:[#allocation15 + $0x20] sm:$0xff]
        %v895 = vld [vmem:[#allocation15 + $0x28] sm:$0xff]
        %v896 = vld [vmem:[#allocation15 + $0x30] sm:$0xff]
        %v897 = vld [vmem:[#allocation15 + $0x38] sm:$0xff]
        %v898 = vld [vmem:[#allocation15 + $0x40] sm:$0xff]
        %v899 = vld [vmem:[#allocation15 + $0x48] sm:$0xff]
        %v900 = vld [vmem:[#allocation15 + $0x50] sm:$0xff]
        %v901 = vld [vmem:[#allocation15 + $0x58] sm:$0xff]
        %v902 = vld [vmem:[#allocation15 + $0x60] sm:$0xff]
        %v903 = vld [vmem:[#allocation15 + $0x68] sm:$0xff]
        %v904 = vld [vmem:[#allocation15 + $0x70] sm:$0xff]
        %v905 = vld [vmem:[#allocation15 + $0x78] sm:$0xff]
        %v906 = vld [vmem:[#allocation15 + $0x80] sm:$0xff]
        %v907 = vld [vmem:[#allocation15 + $0x88] sm:$0xff]
        %v908 = vld [vmem:[#allocation15 + $0x90] sm:$0xff]
        %v909 = vld [vmem:[#allocation15 + $0x98] sm:$0xff]
        %v910 = vld [vmem:[#allocation15 + $0xa0] sm:$0xff]
        %v911 = vld [vmem:[#allocation15 + $0xa8] sm:$0xff]
        %v912 = vld [vmem:[#allocation15 + $0xb0] sm:$0xff]
        %v913 = vld [vmem:[#allocation15 + $0xb8] sm:$0xff]
        %v914 = vld [vmem:[#allocation15 + $0xc0] sm:$0xff]
        %v915 = vld [vmem:[#allocation15 + $0xc8] sm:$0xff]
        %v916 = vld [vmem:[#allocation15 + $0xd0] sm:$0xff]
        %v917 = vld [vmem:[#allocation15 + $0xd8] sm:$0xff]
        %v918 = vld [vmem:[#allocation15 + $0xe0] sm:$0xff]
        %v919 = vld [vmem:[#allocation15 + $0xe8] sm:$0xff]
        %v920 = vld [vmem:[#allocation15 + $0xf0] sm:$0xff]
        %v921 = vld [vmem:[#allocation15 + $0xf8] sm:$0xff]
        %v922 = vld [vmem:[#allocation15 + $0x100] sm:$0xff]
        %v923 = vld [vmem:[#allocation15 + $0x108] sm:$0xff]
        %v924 = vld [vmem:[#allocation15 + $0x110] sm:$0xff]
        %v925 = vld [vmem:[#allocation15 + $0x118] sm:$0xff]
        %v926 = vld [vmem:[#allocation15 + $0x120] sm:$0xff]
        %v927 = vld [vmem:[#allocation15 + $0x128] sm:$0xff]
        %v928 = vld [vmem:[#allocation15 + $0x130] sm:$0xff]
        %v929 = vld [vmem:[#allocation15 + $0x138] sm:$0xff]
        %v930 = vld [vmem:[#allocation15 + $0x140] sm:$0xff]
        %v931 = vld [vmem:[#allocation15 + $0x148] sm:$0xff]
        %v932 = vld [vmem:[#allocation15 + $0x150] sm:$0xff]
        %v933 = vld [vmem:[#allocation15 + $0x158] sm:$0xff]
        %v934 = vld [vmem:[#allocation15 + $0x160] sm:$0xff]
        %v935 = vld [vmem:[#allocation15 + $0x168] sm:$0xff]
        %v936 = vld [vmem:[#allocation15 + $0x170] sm:$0xff]
        %v937 = vld [vmem:[#allocation15 + $0x178] sm:$0xff]
        %v938 = vld [vmem:[#allocation15 + $0x180] sm:$0xff]
        %v939 = vld [vmem:[#allocation15 + $0x188] sm:$0xff]
        %v940 = vld [vmem:[#allocation15 + $0x190] sm:$0xff]
        %v941 = vld [vmem:[#allocation15 + $0x198] sm:$0xff]
        %v942 = vld [vmem:[#allocation15 + $0x1a0] sm:$0xff]
        %v943 = vld [vmem:[#allocation15 + $0x1a8] sm:$0xff]
        %v944 = vld [vmem:[#allocation15 + $0x1b0] sm:$0xff]
        %v945 = vld [vmem:[#allocation15 + $0x1b8] sm:$0xff]
        %v946 = vld [vmem:[#allocation15 + $0x1c0] sm:$0xff]
        %v947 = vld [vmem:[#allocation15 + $0x1c8] sm:$0xff]
        %v948 = vld [vmem:[#allocation15 + $0x1d0] sm:$0xff]
        %v949 = vld [vmem:[#allocation15 + $0x1d8] sm:$0xff]
        %v950 = vld [vmem:[#allocation15 + $0x1e0] sm:$0xff]
        %v951 = vld [vmem:[#allocation15 + $0x1e8] sm:$0xff]
        %v952 = vld [vmem:[#allocation15 + $0x1f0] sm:$0xff]
        %v953 = vld [vmem:[#allocation15 + $0x1f8] sm:$0xff]
        %v954 = vld [vmem:[%s6] sm:$0x3]
        %v956 = vlaneseq
        %v957 = vshrl.u32 %v956, 7
        %v958 = vsub.s32 0, %v957
        %v959 = vrot.slane %v954, %v958
        %v960 = vlaneseq
        %v961 = vshrl.u32 %v960, 7
        %v962 = vsub.s32 1, %v961
        %v963 = vrot.slane %v954, %v962
        %966 = vmatprep.subr.mxu0 %v891
        %967 = vmatpush1.msra.mxu0 %v890
        %968 = vmatprep.subr.mxu0 %v893
        %969 = vmatpush1.msra.mxu0 %v892
        %970 = vmatprep.subr.mxu0 %v895
        %971 = vmatpush1.msra.mxu0 %v894
        %972 = vmatprep.subr.mxu0 %v897
        %973 = vmatpush1.msra.mxu0 %v896
        %974 = vmatprep.subr.mxu0 %v899
        %975 = vmatpush1.msra.mxu0 %v898
        %976 = vmatprep.subr.mxu0 %v901
        %977 = vmatpush1.msra.mxu0 %v900
        %978 = vmatprep.subr.mxu0 %v903
        %979 = vmatpush1.msra.mxu0 %v902
        %980 = vmatprep.subr.mxu0 %v905
        %981 = vmatpush1.msra.mxu0 %v904
        %982 = vmatprep.subr.mxu0 %v907
        %983 = vmatpush1.msra.mxu0 %v906
        %984 = vmatprep.subr.mxu0 %v909
        %985 = vmatpush1.msra.mxu0 %v908
        %986 = vmatprep.subr.mxu0 %v911
        %987 = vmatpush1.msra.mxu0 %v910
        %988 = vmatprep.subr.mxu0 %v913
        %989 = vmatpush1.msra.mxu0 %v912
        %990 = vmatprep.subr.mxu0 %v915
        %991 = vmatpush1.msra.mxu0 %v914
        %992 = vmatprep.subr.mxu0 %v917
        %993 = vmatpush1.msra.mxu0 %v916
        %994 = vmatprep.subr.mxu0 %v919
        %995 = vmatpush1.msra.mxu0 %v918
        %996 = vmatprep.subr.mxu0 %v921
        %997 = vmatpush1.msra.mxu0 %v920
        %998 = vmatprep.subr.mxu0 %v923
        %999 = vmatpush1.msra.mxu0 %v922
        %1000 = vmatprep.subr.mxu0 %v925
        %1001 = vmatpush1.msra.mxu0 %v924
        %1002 = vmatprep.subr.mxu0 %v927
        %1003 = vmatpush1.msra.mxu0 %v926
        %1004 = vmatprep.subr.mxu0 %v929
        %1005 = vmatpush1.msra.mxu0 %v928
        %1006 = vmatprep.subr.mxu0 %v931
        %1007 = vmatpush1.msra.mxu0 %v930
        %1008 = vmatprep.subr.mxu0 %v933
        %1009 = vmatpush1.msra.mxu0 %v932
        %1010 = vmatprep.subr.mxu0 %v935
        %1011 = vmatpush1.msra.mxu0 %v934
        %1012 = vmatprep.subr.mxu0 %v937
        %1013 = vmatpush1.msra.mxu0 %v936
        %1014 = vmatprep.subr.mxu0 %v939
        %1015 = vmatpush1.msra.mxu0 %v938
        %1016 = vmatprep.subr.mxu0 %v941
        %1017 = vmatpush1.msra.mxu0 %v940
        %1018 = vmatprep.subr.mxu0 %v943
        %1019 = vmatpush1.msra.mxu0 %v942
        %1020 = vmatprep.subr.mxu0 %v945
        %1021 = vmatpush1.msra.mxu0 %v944
        %1022 = vmatprep.subr.mxu0 %v947
        %1023 = vmatpush1.msra.mxu0 %v946
        %1024 = vmatprep.subr.mxu0 %v949
        %1025 = vmatpush1.msra.mxu0 %v948
        %1026 = vmatprep.subr.mxu0 %v951
        %1027 = vmatpush1.msra.mxu0 %v950
        %1028 = vmatprep.subr.mxu0 %v953
        %1029 = vmatpush1.msra.mxu0 %v952
        %1030 = vmatprep.mubr.f32.mxu0 %v766
        %1031 = vmatmul.mubr.f32.gmra.mrb[0].mxu0 %v765
        %v1032 = vpop.f32.mrb[0].mxu0
        %v1033 = vadd.f32 %v959, %v1032
        %v1034 = vpop.f32.mrb[0].mxu0
        %v1035 = vadd.f32 %v963, %v1034
        %1036 = vmatprep.mubr.f32.mxu0 %v768
        %1037 = vmatmul.mubr.f32.gmra.mrb[0].mxu0 %v767
        %v1038 = vpop.f32.mrb[0].mxu0
        %v1039 = vadd.f32 %v959, %v1038
        %v1040 = vpop.f32.mrb[0].mxu0
        %v1041 = vadd.f32 %v963, %v1040
        %1042 = vdwg.mxu0
        %v1043 = vmax.f32 %v1033, 0.0
        %v1044 = vmax.f32 %v1035, 0.0
        %v1045 = vmax.f32 %v1039, 0.0
        %v1046 = vmax.f32 %v1041, 0.0
        %v1047 = vand.u32 2147483647, %v1033
        %v1048 = vand.u32 2147483647, %v1035
        %v1049 = vand.u32 2147483647, %v1039
        %v1050 = vand.u32 2147483647, %v1041
        %v1051 = vsub.f32 0.0, %v1047
        %v1052 = vsub.f32 0.0, %v1048
        %v1053 = vsub.f32 0.0, %v1049
        %v1054 = vsub.f32 0.0, %v1050
        %v1055 = vmul.f32 %v1051, 1.442695
        %v1056 = vpow.pop %v1055
        %v1057 = vmul.f32 %v1052, 1.442695
        %v1058 = vpow.pop %v1057
        %v1059 = vmul.f32 %v1053, 1.442695
        %v1060 = vpow.pop %v1059
        %v1061 = vmul.f32 %v1054, 1.442695
        %v1062 = vpow.pop %v1061
        %v1063 = vadd.f32 %v1056, 1.0
        %v1064 = vadd.f32 %v1058, 1.0
        %v1065 = vadd.f32 %v1060, 1.0
        %v1066 = vadd.f32 %v1062, 1.0
        %v1067 = vlog2.pop %v1063
        %v1068 = vmul.f32 %v1067, 0.6931472
        %v1069 = vlog2.pop %v1064
        %v1070 = vmul.f32 %v1069, 0.6931472
        %v1071 = vlog2.pop %v1065
        %v1072 = vmul.f32 %v1071, 0.6931472
        %v1073 = vlog2.pop %v1066
        %v1074 = vmul.f32 %v1073, 0.6931472
        %v1075 = vadd.f32 %v1043, %v1068
        %v1076 = vadd.f32 %v1044, %v1070
        %v1077 = vadd.f32 %v1045, %v1072
        %v1078 = vadd.f32 %v1046, %v1074
        %1079 = vst [vmem:[#allocation3] sm:$0xff] %v1075
        %1080 = vst [vmem:[#allocation3 + $0x8] sm:$0xff] %v1076
        %1081 = vst [vmem:[#allocation3 + $0x10] sm:$0xff] %v1077
        %1082 = vst [vmem:[#allocation3 + $0x18] sm:$0xff] %v1078
        %v1083 = vld [vmem:[%s9] sm:$0xff]
        %v1084 = vld [vmem:[%s9 + $0x8] sm:$0xff]
        %v1085 = vld [vmem:[%s9 + $0x10] sm:$0xff]
        %v1086 = vld [vmem:[%s9 + $0x18] sm:$0xff]
        %p1087 = scmp.eq.s32.totalorder %s33, 0
        // Predicated region
        $region85: #{tpu_custom_call.1} parent=63 // pred_check
          %p1088 = pneg %p1087
        $region86: #{tpu_custom_call.1} parent=63 // pred_check_branch
          %1090 = sbr.rel (%p1088) target = $region88
        $region87: #{tpu_custom_call.1} parent=63 // pred_region
          %1091 = vst [vmem:[#allocation8] sm:$0xff] 0.0
          %1092 = vst [vmem:[#allocation8 + $0x8] sm:$0xff] 0.0
          %1093 = vst [vmem:[#allocation8 + $0x10] sm:$0xff] 0.0
          %1094 = vst [vmem:[#allocation8 + $0x18] sm:$0xff] 0.0
        $region88: #{tpu_custom_call.1} parent=63 // pred_fallthru
          _
        %v1095 = vlaneseq
        %v1096 = vshrl.u32 %v1095, 7
        %v1097 = vlaneseq
        %v1098 = vand.u32 %v1097, 127
        %vm1099 = vcmp.eq.s32.totalorder %v1096, %v1098
        %v1100 = vsel %vm1099, 1, 0
        %v1101 = vcvt.s32.f32 %v1100
        %v1102 = vld [vmem:[#allocation8] sm:$0xff]
        %v1103 = vld [vmem:[#allocation8 + $0x8] sm:$0xff]
        %v1104 = vld [vmem:[#allocation8 + $0x10] sm:$0xff]
        %v1105 = vld [vmem:[#allocation8 + $0x18] sm:$0xff]
        loop: start=0, step=1, limit=2
        $region89: #{tpu_custom_call.1} parent=63 // loop_pre_header
          _
        $region90: #{tpu_custom_call.1} parent=63 // loop_header
          %s1107 = sphi 0, %s1111
          %p1108 = scmp.ge.s32.totalorder %s1107, 2
          %v1112 = vphi %v1102, %v1899
          %v1113 = vphi %v1103, %v1900
          %v1114 = vphi %v1104, %v1901
          %v1115 = vphi %v1105, %v1902
        $region91: #{tpu_custom_call.1} parent=63 // loop_header_branch
          %1110 = sbr.rel (%p1108) target = $region95
        $region92: #{tpu_custom_call.1} parent=63 // loop_body
          %s1116 = smul.u32 %s1107, 8
          %s1117 = sshra.s32 %s1116, 3
          %s1118 = sand.u32 %s1116, 7
          %s1119 = smul.u32 %s1117, 2
          %s1120 = smul.addr %s1119, 8
          %s1121 = scalar_lea.vmem [#allocation2], %s1120
          %v1122 = vld [vmem:[%s1121] sm:$0xff]
          %v1123 = vld [vmem:[%s1121 + $0x8] sm:$0xff]
          %s1124 = smul.addr %s1119, 8
          %s1125 = scalar_lea.vmem [#allocation3], %s1124
          %v1126 = vld [vmem:[%s1125] sm:$0xff]
          %v1127 = vld [vmem:[%s1125 + $0x8] sm:$0xff]
          %v1128 = vmul.f32 %v1126, %v1122
          %v1129 = vmul.f32 %v1127, %v1123
          %s1130 = scalar_lea.vmem [#allocation4], %s1116
          %v1131 = vld [vmem:[%s1130] sm:$0xff]
          %1132 = vxpose.xlu0.b32.start [1/16] %v1131, 128
          %1133 = vxpose.xlu0.b32.cont [2/16] 0.0, 128
          %1134 = vxpose.xlu0.b32.cont [3/16] 0.0, 128
          %1135 = vxpose.xlu0.b32.cont [4/16] 0.0, 128
          %1136 = vxpose.xlu0.b32.cont [5/16] 0.0, 128
          %1137 = vxpose.xlu0.b32.cont [6/16] 0.0, 128
          %1138 = vxpose.xlu0.b32.cont [7/16] 0.0, 128
          %1139 = vxpose.xlu0.b32.cont [8/16] 0.0, 128
          %1140 = vxpose.xlu0.b32.cont [9/16] 0.0, 128
          %1141 = vxpose.xlu0.b32.cont [10/16] 0.0, 128
          %1142 = vxpose.xlu0.b32.cont [11/16] 0.0, 128
          %1143 = vxpose.xlu0.b32.cont [12/16] 0.0, 128
          %1144 = vxpose.xlu0.b32.cont [13/16] 0.0, 128
          %1145 = vxpose.xlu0.b32.cont [14/16] 0.0, 128
          %1146 = vxpose.xlu0.b32.cont [15/16] 0.0, 128
          %1147 = vxpose.xlu0.b32.end [16/16] 0.0, 128
          %v1148 = vpop.trf.xlu0
          %v1149 = vpop.trf.xlu0
          %v1150 = vpop.trf.xlu0
          %v1151 = vpop.trf.xlu0
          %v1152 = vpop.trf.xlu0
          %v1153 = vpop.trf.xlu0
          %v1154 = vpop.trf.xlu0
          %v1155 = vpop.trf.xlu0
          %v1156 = vpop.trf.xlu0
          %v1157 = vpop.trf.xlu0
          %v1158 = vpop.trf.xlu0
          %v1159 = vpop.trf.xlu0
          %v1160 = vpop.trf.xlu0
          %v1161 = vpop.trf.xlu0
          %v1162 = vpop.trf.xlu0
          %v1163 = vpop.trf.xlu0
          %vm1164 = vcmask 64512
          %v1166 = vsel %vm1164, %v1148, 0
          %v1169 = vsel %vm1164, %v1149, 0
          %v1172 = vsel %vm1164, %v1150, 0
          %v1175 = vsel %vm1164, %v1151, 0
          %1177 = vmatprep.subr.mxu0 0.0
          %1178 = vmatpush1.msra.mxu0 %v1101
          %1179 = vmatprep.subr.mxu0 0.0
          %1180 = vmatpush1.msra.mxu0 0.0
          %1181 = vmatprep.subr.mxu0 0.0
          %1182 = vmatpush1.msra.mxu0 0.0
          %1183 = vmatprep.subr.mxu0 0.0
          %1184 = vmatpush1.msra.mxu0 0.0
          %1185 = vmatprep.subr.mxu0 0.0
          %1186 = vmatpush1.msra.mxu0 0.0
          %1187 = vmatprep.subr.mxu0 0.0
          %1188 = vmatpush1.msra.mxu0 0.0
          %1189 = vmatprep.subr.mxu0 0.0
          %1190 = vmatpush1.msra.mxu0 0.0
          %1191 = vmatprep.subr.mxu0 0.0
          %1192 = vmatpush1.msra.mxu0 0.0
          %1193 = vmatprep.subr.mxu0 0.0
          %1194 = vmatpush1.msra.mxu0 0.0
          %1195 = vmatprep.subr.mxu0 0.0
          %1196 = vmatpush1.msra.mxu0 0.0
          %1197 = vmatprep.subr.mxu0 0.0
          %1198 = vmatpush1.msra.mxu0 0.0
          %1199 = vmatprep.subr.mxu0 0.0
          %1200 = vmatpush1.msra.mxu0 0.0
          %1201 = vmatprep.subr.mxu0 0.0
          %1202 = vmatpush1.msra.mxu0 0.0
          %1203 = vmatprep.subr.mxu0 0.0
          %1204 = vmatpush1.msra.mxu0 0.0
          %1205 = vmatprep.subr.mxu0 0.0
          %1206 = vmatpush1.msra.mxu0 0.0
          %1207 = vmatprep.subr.mxu0 0.0
          %1208 = vmatpush1.msra.mxu0 0.0
          %1209 = vmatprep.subr.mxu0 0.0
          %1210 = vmatpush1.msra.mxu0 0.0
          %1211 = vmatprep.subr.mxu0 0.0
          %1212 = vmatpush1.msra.mxu0 0.0
          %1213 = vmatprep.subr.mxu0 0.0
          %1214 = vmatpush1.msra.mxu0 0.0
          %1215 = vmatprep.subr.mxu0 0.0
          %1216 = vmatpush1.msra.mxu0 0.0
          %1217 = vmatprep.subr.mxu0 0.0
          %1218 = vmatpush1.msra.mxu0 0.0
          %1219 = vmatprep.subr.mxu0 0.0
          %1220 = vmatpush1.msra.mxu0 0.0
          %1221 = vmatprep.subr.mxu0 0.0
          %1222 = vmatpush1.msra.mxu0 0.0
          %1223 = vmatprep.subr.mxu0 0.0
          %1224 = vmatpush1.msra.mxu0 0.0
          %1225 = vmatprep.subr.mxu0 0.0
          %1226 = vmatpush1.msra.mxu0 0.0
          %1227 = vmatprep.subr.mxu0 0.0
          %1228 = vmatpush1.msra.mxu0 0.0
          %1229 = vmatprep.subr.mxu0 0.0
          %1230 = vmatpush1.msra.mxu0 0.0
          %1231 = vmatprep.subr.mxu0 0.0
          %1232 = vmatpush1.msra.mxu0 0.0
          %1233 = vmatprep.subr.mxu0 0.0
          %1234 = vmatpush1.msra.mxu0 0.0
          %1235 = vmatprep.subr.mxu0 0.0
          %1236 = vmatpush1.msra.mxu0 0.0
          %1237 = vmatprep.subr.mxu0 0.0
          %1238 = vmatpush1.msra.mxu0 0.0
          %1239 = vmatprep.subr.mxu0 0.0
          %1240 = vmatpush1.msra.mxu0 0.0
          %1241 = vmatprep.mubr.f32.mxu0 0.0
          %1242 = vmatmul.mubr.f32.gmra.mrb[0].mxu0 %v1166
          %v1243 = vpop.f32.mrb[0].mxu0
          %v1244 = vadd.f32 0.0, %v1243
          %v1245 = vpop.f32.mrb[0].mxu0
          %1246 = vmatprep.mubr.f32.mxu0 0.0
          %1247 = vmatmul.mubr.f32.gmra.mrb[0].mxu0 %v1169
          %v1248 = vpop.f32.mrb[0].mxu0
          %v1249 = vadd.f32 0.0, %v1248
          %v1250 = vpop.f32.mrb[0].mxu0
          %1251 = vmatprep.mubr.f32.mxu0 0.0
          %1252 = vmatmul.mubr.f32.gmra.mrb[0].mxu0 %v1172
          %v1253 = vpop.f32.mrb[0].mxu0
          %v1254 = vadd.f32 0.0, %v1253
          %v1255 = vpop.f32.mrb[0].mxu0
          %1256 = vmatprep.mubr.f32.mxu0 0.0
          %1257 = vmatmul.mubr.f32.gmra.mrb[0].mxu0 %v1175
          %v1258 = vpop.f32.mrb[0].mxu0
          %v1259 = vadd.f32 0.0, %v1258
          %v1260 = vpop.f32.mrb[0].mxu0
          %1261 = vdwg.mxu0
          %v1262 = vlaneseq
          %v1263 = vshrl.u32 %v1262, 7
          %v1264 = vsub.s32 0, %v1263
          %v1265 = vrot.slane %v1126, %v1264
          %v1266 = vlaneseq
          %v1267 = vshrl.u32 %v1266, 7
          %v1268 = vsub.s32 0, %v1267
          %v1269 = vrot.slane %v1127, %v1268
          %v1270 = vmul.f32 %v1265, %v1083
          %v1271 = vmul.f32 %v1269, %v1084
          %v1272 = vmul.f32 %v1265, %v1085
          %v1273 = vmul.f32 %v1269, %v1086
          %v1274 = vmul.f32 %v1270, 1.442695
          %v1275 = vpow.pop %v1274
          %v1276 = vmul.f32 %v1271, 1.442695
          %v1277 = vpow.pop %v1276
          %v1278 = vmul.f32 %v1272, 1.442695
          %v1279 = vpow.pop %v1278
          %v1280 = vmul.f32 %v1273, 1.442695
          %v1281 = vpow.pop %v1280
          %1282 = vst [vmem:[#allocation7] sm:$0xff] %v1275
          %1283 = vst [vmem:[#allocation7 + $0x8] sm:$0xff] %v1277
          %1284 = vst [vmem:[#allocation7 + $0x10] sm:$0xff] %v1279
          %1285 = vst [vmem:[#allocation7 + $0x18] sm:$0xff] %v1281
          %v1286 = vlaneseq
          %v1287 = vshrl.u32 %v1286, 7
          %v1288 = vsub.s32 1, %v1287
          %v1289 = vrot.slane %v1126, %v1288
          %v1290 = vlaneseq
          %v1291 = vshrl.u32 %v1290, 7
          %v1292 = vsub.s32 1, %v1291
          %v1293 = vrot.slane %v1127, %v1292
          %v1294 = vmul.f32 %v1289, %v1083
          %v1295 = vmul.f32 %v1293, %v1084
          %v1296 = vmul.f32 %v1289, %v1085
          %v1297 = vmul.f32 %v1293, %v1086
          %v1298 = vmul.f32 %v1294, 1.442695
          %v1299 = vpow.pop %v1298
          %v1300 = vmul.f32 %v1295, 1.442695
          %v1301 = vpow.pop %v1300
          %v1302 = vmul.f32 %v1296, 1.442695
          %v1303 = vpow.pop %v1302
          %v1304 = vmul.f32 %v1297, 1.442695
          %v1305 = vpow.pop %v1304
          %s1306 = scalar_lea.vmem [#allocation7], 32
          %1307 = vst [vmem:[%s1306] sm:$0xff] %v1299
          %1308 = vst [vmem:[%s1306 + $0x8] sm:$0xff] %v1301
          %1309 = vst [vmem:[%s1306 + $0x10] sm:$0xff] %v1303
          %1310 = vst [vmem:[%s1306 + $0x18] sm:$0xff] %v1305
          %v1311 = vlaneseq
          %v1312 = vshrl.u32 %v1311, 7
          %v1313 = vsub.s32 2, %v1312
          %v1314 = vrot.slane %v1126, %v1313
          %v1315 = vlaneseq
          %v1316 = vshrl.u32 %v1315, 7
          %v1317 = vsub.s32 2, %v1316
          %v1318 = vrot.slane %v1127, %v1317
          %v1319 = vmul.f32 %v1314, %v1083
          %v1320 = vmul.f32 %v1318, %v1084
          %v1321 = vmul.f32 %v1314, %v1085
          %v1322 = vmul.f32 %v1318, %v1086
          %v1323 = vmul.f32 %v1319, 1.442695
          %v1324 = vpow.pop %v1323
          %v1325 = vmul.f32 %v1320, 1.442695
          %v1326 = vpow.pop %v1325
          %v1327 = vmul.f32 %v1321, 1.442695
          %v1328 = vpow.pop %v1327
          %v1329 = vmul.f32 %v1322, 1.442695
          %v1330 = vpow.pop %v1329
          %s1331 = scalar_lea.vmem [#allocation7], 64
          %1332 = vst [vmem:[%s1331] sm:$0xff] %v1324
          %1333 = vst [vmem:[%s1331 + $0x8] sm:$0xff] %v1326
          %1334 = vst [vmem:[%s1331 + $0x10] sm:$0xff] %v1328
          %1335 = vst [vmem:[%s1331 + $0x18] sm:$0xff] %v1330
          %v1336 = vlaneseq
          %v1337 = vshrl.u32 %v1336, 7
          %v1338 = vsub.s32 3, %v1337
          %v1339 = vrot.slane %v1126, %v1338
          %v1340 = vlaneseq
          %v1341 = vshrl.u32 %v1340, 7
          %v1342 = vsub.s32 3, %v1341
          %v1343 = vrot.slane %v1127, %v1342
          %v1344 = vmul.f32 %v1339, %v1083
          %v1345 = vmul.f32 %v1343, %v1084
          %v1346 = vmul.f32 %v1339, %v1085
          %v1347 = vmul.f32 %v1343, %v1086
          %v1348 = vmul.f32 %v1344, 1.442695
          %v1349 = vpow.pop %v1348
          %v1350 = vmul.f32 %v1345, 1.442695
          %v1351 = vpow.pop %v1350
          %v1352 = vmul.f32 %v1346, 1.442695
          %v1353 = vpow.pop %v1352
          %v1354 = vmul.f32 %v1347, 1.442695
          %v1355 = vpow.pop %v1354
          %s1356 = scalar_lea.vmem [#allocation7], 96
          %1357 = vst [vmem:[%s1356] sm:$0xff] %v1349
          %1358 = vst [vmem:[%s1356 + $0x8] sm:$0xff] %v1351
          %1359 = vst [vmem:[%s1356 + $0x10] sm:$0xff] %v1353
          %1360 = vst [vmem:[%s1356 + $0x18] sm:$0xff] %v1355
          %v1361 = vlaneseq
          %v1362 = vshrl.u32 %v1361, 7
          %v1363 = vsub.s32 4, %v1362
          %v1364 = vrot.slane %v1126, %v1363
          %v1365 = vlaneseq
          %v1366 = vshrl.u32 %v1365, 7
          %v1367 = vsub.s32 4, %v1366
          %v1368 = vrot.slane %v1127, %v1367
          %v1369 = vmul.f32 %v1364, %v1083
          %v1370 = vmul.f32 %v1368, %v1084
          %v1371 = vmul.f32 %v1364, %v1085
          %v1372 = vmul.f32 %v1368, %v1086
          %v1373 = vmul.f32 %v1369, 1.442695
          %v1374 = vpow.pop %v1373
          %v1375 = vmul.f32 %v1370, 1.442695
          %v1376 = vpow.pop %v1375
          %v1377 = vmul.f32 %v1371, 1.442695
          %v1378 = vpow.pop %v1377
          %v1379 = vmul.f32 %v1372, 1.442695
          %v1380 = vpow.pop %v1379
          %s1381 = scalar_lea.vmem [#allocation7], 128
          %1382 = vst [vmem:[%s1381] sm:$0xff] %v1374
          %1383 = vst [vmem:[%s1381 + $0x8] sm:$0xff] %v1376
          %1384 = vst [vmem:[%s1381 + $0x10] sm:$0xff] %v1378
          %1385 = vst [vmem:[%s1381 + $0x18] sm:$0xff] %v1380
          %v1386 = vlaneseq
          %v1387 = vshrl.u32 %v1386, 7
          %v1388 = vsub.s32 5, %v1387
          %v1389 = vrot.slane %v1126, %v1388
          %v1390 = vlaneseq
          %v1391 = vshrl.u32 %v1390, 7
          %v1392 = vsub.s32 5, %v1391
          %v1393 = vrot.slane %v1127, %v1392
          %v1394 = vmul.f32 %v1389, %v1083
          %v1395 = vmul.f32 %v1393, %v1084
          %v1396 = vmul.f32 %v1389, %v1085
          %v1397 = vmul.f32 %v1393, %v1086
          %v1398 = vmul.f32 %v1394, 1.442695
          %v1399 = vpow.pop %v1398
          %v1400 = vmul.f32 %v1395, 1.442695
          %v1401 = vpow.pop %v1400
          %v1402 = vmul.f32 %v1396, 1.442695
          %v1403 = vpow.pop %v1402
          %v1404 = vmul.f32 %v1397, 1.442695
          %v1405 = vpow.pop %v1404
          %s1406 = scalar_lea.vmem [#allocation7], 160
          %1407 = vst [vmem:[%s1406] sm:$0xff] %v1399
          %1408 = vst [vmem:[%s1406 + $0x8] sm:$0xff] %v1401
          %1409 = vst [vmem:[%s1406 + $0x10] sm:$0xff] %v1403
          %1410 = vst [vmem:[%s1406 + $0x18] sm:$0xff] %v1405
          %v1411 = vlaneseq
          %v1412 = vshrl.u32 %v1411, 7
          %v1413 = vsub.s32 6, %v1412
          %v1414 = vrot.slane %v1126, %v1413
          %v1415 = vlaneseq
          %v1416 = vshrl.u32 %v1415, 7
          %v1417 = vsub.s32 6, %v1416
          %v1418 = vrot.slane %v1127, %v1417
          %v1419 = vmul.f32 %v1414, %v1083
          %v1420 = vmul.f32 %v1418, %v1084
          %v1421 = vmul.f32 %v1414, %v1085
          %v1422 = vmul.f32 %v1418, %v1086
          %v1423 = vmul.f32 %v1419, 1.442695
          %v1424 = vpow.pop %v1423
          %v1425 = vmul.f32 %v1420, 1.442695
          %v1426 = vpow.pop %v1425
          %v1427 = vmul.f32 %v1421, 1.442695
          %v1428 = vpow.pop %v1427
          %v1429 = vmul.f32 %v1422, 1.442695
          %v1430 = vpow.pop %v1429
          %s1431 = scalar_lea.vmem [#allocation7], 192
          %1432 = vst [vmem:[%s1431] sm:$0xff] %v1424
          %1433 = vst [vmem:[%s1431 + $0x8] sm:$0xff] %v1426
          %1434 = vst [vmem:[%s1431 + $0x10] sm:$0xff] %v1428
          %1435 = vst [vmem:[%s1431 + $0x18] sm:$0xff] %v1430
          %v1436 = vlaneseq
          %v1437 = vshrl.u32 %v1436, 7
          %v1438 = vsub.s32 7, %v1437
          %v1439 = vrot.slane %v1126, %v1438
          %v1440 = vlaneseq
          %v1441 = vshrl.u32 %v1440, 7
          %v1442 = vsub.s32 7, %v1441
          %v1443 = vrot.slane %v1127, %v1442
          %v1444 = vmul.f32 %v1439, %v1083
          %v1445 = vmul.f32 %v1443, %v1084
          %v1446 = vmul.f32 %v1439, %v1085
          %v1447 = vmul.f32 %v1443, %v1086
          %v1448 = vmul.f32 %v1444, 1.442695
          %v1449 = vpow.pop %v1448
          %v1450 = vmul.f32 %v1445, 1.442695
          %v1451 = vpow.pop %v1450
          %v1452 = vmul.f32 %v1446, 1.442695
          %v1453 = vpow.pop %v1452
          %v1454 = vmul.f32 %v1447, 1.442695
          %v1455 = vpow.pop %v1454
          %s1456 = scalar_lea.vmem [#allocation7], 224
          %1457 = vst [vmem:[%s1456] sm:$0xff] %v1449
          %1458 = vst [vmem:[%s1456 + $0x8] sm:$0xff] %v1451
          %1459 = vst [vmem:[%s1456 + $0x10] sm:$0xff] %v1453
          %1460 = vst [vmem:[%s1456 + $0x18] sm:$0xff] %v1455
          %1462 = vset.pattern.permute.xlu0 0
          %1463 = vperm.xlu0 %1462, %v1244
          %v1464 = vpop.permute.xlu0 %1463
          %1467 = vset.pattern.permute.xlu0 0
          %1468 = vperm.xlu0 %1467, %v1249
          %v1469 = vpop.permute.xlu0 %1468
          %v1471 = vlaneseq
          %v1472 = vshrl.u32 %v1471, 7
          %v1473 = vsub.s32 0, %v1472
          %v1474 = vrot.slane %v1128, %v1473
          %v1475 = vlaneseq
          %v1476 = vshrl.u32 %v1475, 7
          %v1477 = vsub.s32 0, %v1476
          %v1478 = vrot.slane %v1129, %v1477
          %v1479 = vmul.f32 %v1464, %v1474
          %v1480 = vmul.f32 %v1464, %v1478
          %v1481 = vmul.f32 %v1469, %v1474
          %v1482 = vmul.f32 %v1469, %v1478
          %v1483 = vld [vmem:[#allocation7] sm:$0xff]
          %v1484 = vld [vmem:[#allocation7 + $0x8] sm:$0xff]
          %v1485 = vld [vmem:[#allocation7 + $0x10] sm:$0xff]
          %v1486 = vld [vmem:[#allocation7 + $0x18] sm:$0xff]
          %v1487 = vmul.f32 %v1112, %v1483
          %v1488 = vmul.f32 %v1113, %v1484
          %v1489 = vmul.f32 %v1114, %v1485
          %v1490 = vmul.f32 %v1115, %v1486
          %v1491 = vadd.f32 %v1487, %v1479
          %v1492 = vadd.f32 %v1488, %v1480
          %v1493 = vadd.f32 %v1489, %v1481
          %v1494 = vadd.f32 %v1490, %v1482
          %1496 = vset.pattern.permute.xlu0 0
          %1497 = vperm.xlu0 %1496, %v1254
          %v1498 = vpop.permute.xlu0 %1497
          %1501 = vset.pattern.permute.xlu0 0
          %1502 = vperm.xlu0 %1501, %v1259
          %v1503 = vpop.permute.xlu0 %1502
          %v1505 = vmul.f32 %v1498, %v1491
          %v1506 = vmul.f32 %v1498, %v1492
          %v1507 = vmul.f32 %v1503, %v1493
          %v1508 = vmul.f32 %v1503, %v1494
          %v1509 = vadd.f32 %v1505, %v1507
          %v1510 = vrot.slane %v1509, 4
          %v1511 = vadd.f32 %v1509, %v1510
          %v1512 = vrot.slane %v1511, 2
          %v1513 = vadd.f32 %v1511, %v1512
          %v1514 = vrot.slane %v1513, 1
          %v1515 = vadd.f32 %v1513, %v1514
          %v1516 = vadd.f32 %v1506, %v1508
          %v1517 = vrot.slane %v1516, 4
          %v1518 = vadd.f32 %v1516, %v1517
          %v1519 = vrot.slane %v1518, 2
          %v1520 = vadd.f32 %v1518, %v1519
          %v1521 = vrot.slane %v1520, 1
          %v1522 = vadd.f32 %v1520, %v1521
          %1523 = vset.pattern.permute.xlu0 1
          %1524 = vperm.xlu0 %1523, %v1244
          %v1525 = vpop.permute.xlu0 %1524
          %1527 = vset.pattern.permute.xlu0 1
          %1528 = vperm.xlu0 %1527, %v1249
          %v1529 = vpop.permute.xlu0 %1528
          %v1531 = vlaneseq
          %v1532 = vshrl.u32 %v1531, 7
          %v1533 = vsub.s32 1, %v1532
          %v1534 = vrot.slane %v1128, %v1533
          %v1535 = vlaneseq
          %v1536 = vshrl.u32 %v1535, 7
          %v1537 = vsub.s32 1, %v1536
          %v1538 = vrot.slane %v1129, %v1537
          %v1539 = vmul.f32 %v1525, %v1534
          %v1540 = vmul.f32 %v1525, %v1538
          %v1541 = vmul.f32 %v1529, %v1534
          %v1542 = vmul.f32 %v1529, %v1538
          %v1543 = vld [vmem:[%s1306] sm:$0xff]
          %v1544 = vld [vmem:[%s1306 + $0x8] sm:$0xff]
          %v1545 = vld [vmem:[%s1306 + $0x10] sm:$0xff]
          %v1546 = vld [vmem:[%s1306 + $0x18] sm:$0xff]
          %v1547 = vmul.f32 %v1491, %v1543
          %v1548 = vmul.f32 %v1492, %v1544
          %v1549 = vmul.f32 %v1493, %v1545
          %v1550 = vmul.f32 %v1494, %v1546
          %v1551 = vadd.f32 %v1547, %v1539
          %v1552 = vadd.f32 %v1548, %v1540
          %v1553 = vadd.f32 %v1549, %v1541
          %v1554 = vadd.f32 %v1550, %v1542
          %1555 = vset.pattern.permute.xlu0 1
          %1556 = vperm.xlu0 %1555, %v1254
          %v1557 = vpop.permute.xlu0 %1556
          %1559 = vset.pattern.permute.xlu0 1
          %1560 = vperm.xlu0 %1559, %v1259
          %v1561 = vpop.permute.xlu0 %1560
          %v1563 = vmul.f32 %v1557, %v1551
          %v1564 = vmul.f32 %v1557, %v1552
          %v1565 = vmul.f32 %v1561, %v1553
          %v1566 = vmul.f32 %v1561, %v1554
          %v1567 = vadd.f32 %v1563, %v1565
          %v1568 = vrot.slane %v1567, 4
          %v1569 = vadd.f32 %v1567, %v1568
          %v1570 = vrot.slane %v1569, 2
          %v1571 = vadd.f32 %v1569, %v1570
          %v1572 = vrot.slane %v1571, 1
          %v1573 = vadd.f32 %v1571, %v1572
          %v1574 = vadd.f32 %v1564, %v1566
          %v1575 = vrot.slane %v1574, 4
          %v1576 = vadd.f32 %v1574, %v1575
          %v1577 = vrot.slane %v1576, 2
          %v1578 = vadd.f32 %v1576, %v1577
          %v1579 = vrot.slane %v1578, 1
          %v1580 = vadd.f32 %v1578, %v1579
          %1581 = vset.pattern.permute.xlu0 2
          %1582 = vperm.xlu0 %1581, %v1244
          %v1583 = vpop.permute.xlu0 %1582
          %1585 = vset.pattern.permute.xlu0 2
          %1586 = vperm.xlu0 %1585, %v1249
          %v1587 = vpop.permute.xlu0 %1586
          %v1589 = vlaneseq
          %v1590 = vshrl.u32 %v1589, 7
          %v1591 = vsub.s32 2, %v1590
          %v1592 = vrot.slane %v1128, %v1591
          %v1593 = vlaneseq
          %v1594 = vshrl.u32 %v1593, 7
          %v1595 = vsub.s32 2, %v1594
          %v1596 = vrot.slane %v1129, %v1595
          %v1597 = vmul.f32 %v1583, %v1592
          %v1598 = vmul.f32 %v1583, %v1596
          %v1599 = vmul.f32 %v1587, %v1592
          %v1600 = vmul.f32 %v1587, %v1596
          %v1601 = vld [vmem:[%s1331] sm:$0xff]
          %v1602 = vld [vmem:[%s1331 + $0x8] sm:$0xff]
          %v1603 = vld [vmem:[%s1331 + $0x10] sm:$0xff]
          %v1604 = vld [vmem:[%s1331 + $0x18] sm:$0xff]
          %v1605 = vmul.f32 %v1551, %v1601
          %v1606 = vmul.f32 %v1552, %v1602
          %v1607 = vmul.f32 %v1553, %v1603
          %v1608 = vmul.f32 %v1554, %v1604
          %v1609 = vadd.f32 %v1605, %v1597
          %v1610 = vadd.f32 %v1606, %v1598
          %v1611 = vadd.f32 %v1607, %v1599
          %v1612 = vadd.f32 %v1608, %v1600
          %1613 = vset.pattern.permute.xlu0 2
          %1614 = vperm.xlu0 %1613, %v1254
          %v1615 = vpop.permute.xlu0 %1614
          %1617 = vset.pattern.permute.xlu0 2
          %1618 = vperm.xlu0 %1617, %v1259
          %v1619 = vpop.permute.xlu0 %1618
          %v1621 = vmul.f32 %v1615, %v1609
          %v1622 = vmul.f32 %v1615, %v1610
          %v1623 = vmul.f32 %v1619, %v1611
          %v1624 = vmul.f32 %v1619, %v1612
          %v1625 = vadd.f32 %v1621, %v1623
          %v1626 = vrot.slane %v1625, 4
          %v1627 = vadd.f32 %v1625, %v1626
          %v1628 = vrot.slane %v1627, 2
          %v1629 = vadd.f32 %v1627, %v1628
          %v1630 = vrot.slane %v1629, 1
          %v1631 = vadd.f32 %v1629, %v1630
          %v1632 = vadd.f32 %v1622, %v1624
          %v1633 = vrot.slane %v1632, 4
          %v1634 = vadd.f32 %v1632, %v1633
          %v1635 = vrot.slane %v1634, 2
          %v1636 = vadd.f32 %v1634, %v1635
          %v1637 = vrot.slane %v1636, 1
          %v1638 = vadd.f32 %v1636, %v1637
          %1639 = vset.pattern.permute.xlu0 3
          %1640 = vperm.xlu0 %1639, %v1244
          %v1641 = vpop.permute.xlu0 %1640
          %1643 = vset.pattern.permute.xlu0 3
          %1644 = vperm.xlu0 %1643, %v1249
          %v1645 = vpop.permute.xlu0 %1644
          %v1647 = vlaneseq
          %v1648 = vshrl.u32 %v1647, 7
          %v1649 = vsub.s32 3, %v1648
          %v1650 = vrot.slane %v1128, %v1649
          %v1651 = vlaneseq
          %v1652 = vshrl.u32 %v1651, 7
          %v1653 = vsub.s32 3, %v1652
          %v1654 = vrot.slane %v1129, %v1653
          %v1655 = vmul.f32 %v1641, %v1650
          %v1656 = vmul.f32 %v1641, %v1654
          %v1657 = vmul.f32 %v1645, %v1650
          %v1658 = vmul.f32 %v1645, %v1654
          %v1659 = vld [vmem:[%s1356] sm:$0xff]
          %v1660 = vld [vmem:[%s1356 + $0x8] sm:$0xff]
          %v1661 = vld [vmem:[%s1356 + $0x10] sm:$0xff]
          %v1662 = vld [vmem:[%s1356 + $0x18] sm:$0xff]
          %v1663 = vmul.f32 %v1609, %v1659
          %v1664 = vmul.f32 %v1610, %v1660
          %v1665 = vmul.f32 %v1611, %v1661
          %v1666 = vmul.f32 %v1612, %v1662
          %v1667 = vadd.f32 %v1663, %v1655
          %v1668 = vadd.f32 %v1664, %v1656
          %v1669 = vadd.f32 %v1665, %v1657
          %v1670 = vadd.f32 %v1666, %v1658
          %1671 = vset.pattern.permute.xlu0 3
          %1672 = vperm.xlu0 %1671, %v1254
          %v1673 = vpop.permute.xlu0 %1672
          %1675 = vset.pattern.permute.xlu0 3
          %1676 = vperm.xlu0 %1675, %v1259
          %v1677 = vpop.permute.xlu0 %1676
          %v1679 = vmul.f32 %v1673, %v1667
          %v1680 = vmul.f32 %v1673, %v1668
          %v1681 = vmul.f32 %v1677, %v1669
          %v1682 = vmul.f32 %v1677, %v1670
          %v1683 = vadd.f32 %v1679, %v1681
          %v1684 = vrot.slane %v1683, 4
          %v1685 = vadd.f32 %v1683, %v1684
          %v1686 = vrot.slane %v1685, 2
          %v1687 = vadd.f32 %v1685, %v1686
          %v1688 = vrot.slane %v1687, 1
          %v1689 = vadd.f32 %v1687, %v1688
          %v1690 = vadd.f32 %v1680, %v1682
          %v1691 = vrot.slane %v1690, 4
          %v1692 = vadd.f32 %v1690, %v1691
          %v1693 = vrot.slane %v1692, 2
          %v1694 = vadd.f32 %v1692, %v1693
          %v1695 = vrot.slane %v1694, 1
          %v1696 = vadd.f32 %v1694, %v1695
          %1697 = vset.pattern.permute.xlu0 4
          %1698 = vperm.xlu0 %1697, %v1244
          %v1699 = vpop.permute.xlu0 %1698
          %1701 = vset.pattern.permute.xlu0 4
          %1702 = vperm.xlu0 %1701, %v1249
          %v1703 = vpop.permute.xlu0 %1702
          %v1705 = vlaneseq
          %v1706 = vshrl.u32 %v1705, 7
          %v1707 = vsub.s32 4, %v1706
          %v1708 = vrot.slane %v1128, %v1707
          %v1709 = vlaneseq
          %v1710 = vshrl.u32 %v1709, 7
          %v1711 = vsub.s32 4, %v1710
          %v1712 = vrot.slane %v1129, %v1711
          %v1713 = vmul.f32 %v1699, %v1708
          %v1714 = vmul.f32 %v1699, %v1712
          %v1715 = vmul.f32 %v1703, %v1708
          %v1716 = vmul.f32 %v1703, %v1712
          %v1717 = vld [vmem:[%s1381] sm:$0xff]
          %v1718 = vld [vmem:[%s1381 + $0x8] sm:$0xff]
          %v1719 = vld [vmem:[%s1381 + $0x10] sm:$0xff]
          %v1720 = vld [vmem:[%s1381 + $0x18] sm:$0xff]
          %v1721 = vmul.f32 %v1667, %v1717
          %v1722 = vmul.f32 %v1668, %v1718
          %v1723 = vmul.f32 %v1669, %v1719
          %v1724 = vmul.f32 %v1670, %v1720
          %v1725 = vadd.f32 %v1721, %v1713
          %v1726 = vadd.f32 %v1722, %v1714
          %v1727 = vadd.f32 %v1723, %v1715
          %v1728 = vadd.f32 %v1724, %v1716
          %1729 = vset.pattern.permute.xlu0 4
          %1730 = vperm.xlu0 %1729, %v1254
          %v1731 = vpop.permute.xlu0 %1730
          %1733 = vset.pattern.permute.xlu0 4
          %1734 = vperm.xlu0 %1733, %v1259
          %v1735 = vpop.permute.xlu0 %1734
          %v1737 = vmul.f32 %v1731, %v1725
          %v1738 = vmul.f32 %v1731, %v1726
          %v1739 = vmul.f32 %v1735, %v1727
          %v1740 = vmul.f32 %v1735, %v1728
          %v1741 = vadd.f32 %v1737, %v1739
          %v1742 = vrot.slane %v1741, 4
          %v1743 = vadd.f32 %v1741, %v1742
          %v1744 = vrot.slane %v1743, 2
          %v1745 = vadd.f32 %v1743, %v1744
          %v1746 = vrot.slane %v1745, 1
          %v1747 = vadd.f32 %v1745, %v1746
          %v1748 = vadd.f32 %v1738, %v1740
          %v1749 = vrot.slane %v1748, 4
          %v1750 = vadd.f32 %v1748, %v1749
          %v1751 = vrot.slane %v1750, 2
          %v1752 = vadd.f32 %v1750, %v1751
          %v1753 = vrot.slane %v1752, 1
          %v1754 = vadd.f32 %v1752, %v1753
          %1755 = vset.pattern.permute.xlu0 5
          %1756 = vperm.xlu0 %1755, %v1244
          %v1757 = vpop.permute.xlu0 %1756
          %1759 = vset.pattern.permute.xlu0 5
          %1760 = vperm.xlu0 %1759, %v1249
          %v1761 = vpop.permute.xlu0 %1760
          %v1763 = vlaneseq
          %v1764 = vshrl.u32 %v1763, 7
          %v1765 = vsub.s32 5, %v1764
          %v1766 = vrot.slane %v1128, %v1765
          %v1767 = vlaneseq
          %v1768 = vshrl.u32 %v1767, 7
          %v1769 = vsub.s32 5, %v1768
          %v1770 = vrot.slane %v1129, %v1769
          %v1771 = vmul.f32 %v1757, %v1766
          %v1772 = vmul.f32 %v1757, %v1770
          %v1773 = vmul.f32 %v1761, %v1766
          %v1774 = vmul.f32 %v1761, %v1770
          %v1775 = vld [vmem:[%s1406] sm:$0xff]
          %v1776 = vld [vmem:[%s1406 + $0x8] sm:$0xff]
          %v1777 = vld [vmem:[%s1406 + $0x10] sm:$0xff]
          %v1778 = vld [vmem:[%s1406 + $0x18] sm:$0xff]
          %v1779 = vmul.f32 %v1725, %v1775
          %v1780 = vmul.f32 %v1726, %v1776
          %v1781 = vmul.f32 %v1727, %v1777
          %v1782 = vmul.f32 %v1728, %v1778
          %v1783 = vadd.f32 %v1779, %v1771
          %v1784 = vadd.f32 %v1780, %v1772
          %v1785 = vadd.f32 %v1781, %v1773
          %v1786 = vadd.f32 %v1782, %v1774
          %1787 = vset.pattern.permute.xlu0 5
          %1788 = vperm.xlu0 %1787, %v1254
          %v1789 = vpop.permute.xlu0 %1788
          %1791 = vset.pattern.permute.xlu0 5
          %1792 = vperm.xlu0 %1791, %v1259
          %v1793 = vpop.permute.xlu0 %1792
          %v1795 = vmul.f32 %v1789, %v1783
          %v1796 = vmul.f32 %v1789, %v1784
          %v1797 = vmul.f32 %v1793, %v1785
          %v1798 = vmul.f32 %v1793, %v1786
          %v1799 = vadd.f32 %v1795, %v1797
          %v1800 = vrot.slane %v1799, 4
          %v1801 = vadd.f32 %v1799, %v1800
          %v1802 = vrot.slane %v1801, 2
          %v1803 = vadd.f32 %v1801, %v1802
          %v1804 = vrot.slane %v1803, 1
          %v1805 = vadd.f32 %v1803, %v1804
          %v1806 = vadd.f32 %v1796, %v1798
          %v1807 = vrot.slane %v1806, 4
          %v1808 = vadd.f32 %v1806, %v1807
          %v1809 = vrot.slane %v1808, 2
          %v1810 = vadd.f32 %v1808, %v1809
          %v1811 = vrot.slane %v1810, 1
          %v1812 = vadd.f32 %v1810, %v1811
          %1813 = vset.pattern.permute.xlu0 6
          %1814 = vperm.xlu0 %1813, %v1244
          %v1815 = vpop.permute.xlu0 %1814
          %1817 = vset.pattern.permute.xlu0 6
          %1818 = vperm.xlu0 %1817, %v1249
          %v1819 = vpop.permute.xlu0 %1818
          %v1821 = vlaneseq
          %v1822 = vshrl.u32 %v1821, 7
          %v1823 = vsub.s32 6, %v1822
          %v1824 = vrot.slane %v1128, %v1823
          %v1825 = vlaneseq
          %v1826 = vshrl.u32 %v1825, 7
          %v1827 = vsub.s32 6, %v1826
          %v1828 = vrot.slane %v1129, %v1827
          %v1829 = vmul.f32 %v1815, %v1824
          %v1830 = vmul.f32 %v1815, %v1828
          %v1831 = vmul.f32 %v1819, %v1824
          %v1832 = vmul.f32 %v1819, %v1828
          %v1833 = vld [vmem:[%s1431] sm:$0xff]
          %v1834 = vld [vmem:[%s1431 + $0x8] sm:$0xff]
          %v1835 = vld [vmem:[%s1431 + $0x10] sm:$0xff]
          %v1836 = vld [vmem:[%s1431 + $0x18] sm:$0xff]
          %v1837 = vmul.f32 %v1783, %v1833
          %v1838 = vmul.f32 %v1784, %v1834
          %v1839 = vmul.f32 %v1785, %v1835
          %v1840 = vmul.f32 %v1786, %v1836
          %v1841 = vadd.f32 %v1837, %v1829
          %v1842 = vadd.f32 %v1838, %v1830
          %v1843 = vadd.f32 %v1839, %v1831
          %v1844 = vadd.f32 %v1840, %v1832
          %1845 = vset.pattern.permute.xlu0 6
          %1846 = vperm.xlu0 %1845, %v1254
          %v1847 = vpop.permute.xlu0 %1846
          %1849 = vset.pattern.permute.xlu0 6
          %1850 = vperm.xlu0 %1849, %v1259
          %v1851 = vpop.permute.xlu0 %1850
          %v1853 = vmul.f32 %v1847, %v1841
          %v1854 = vmul.f32 %v1847, %v1842
          %v1855 = vmul.f32 %v1851, %v1843
          %v1856 = vmul.f32 %v1851, %v1844
          %v1857 = vadd.f32 %v1853, %v1855
          %v1858 = vrot.slane %v1857, 4
          %v1859 = vadd.f32 %v1857, %v1858
          %v1860 = vrot.slane %v1859, 2
          %v1861 = vadd.f32 %v1859, %v1860
          %v1862 = vrot.slane %v1861, 1
          %v1863 = vadd.f32 %v1861, %v1862
          %v1864 = vadd.f32 %v1854, %v1856
          %v1865 = vrot.slane %v1864, 4
          %v1866 = vadd.f32 %v1864, %v1865
          %v1867 = vrot.slane %v1866, 2
          %v1868 = vadd.f32 %v1866, %v1867
          %v1869 = vrot.slane %v1868, 1
          %v1870 = vadd.f32 %v1868, %v1869
          %1871 = vset.pattern.permute.xlu0 7
          %1872 = vperm.xlu0 %1871, %v1244
          %v1873 = vpop.permute.xlu0 %1872
          %1875 = vset.pattern.permute.xlu0 7
          %1876 = vperm.xlu0 %1875, %v1249
          %v1877 = vpop.permute.xlu0 %1876
          %v1879 = vlaneseq
          %v1880 = vshrl.u32 %v1879, 7
          %v1881 = vsub.s32 7, %v1880
          %v1882 = vrot.slane %v1128, %v1881
          %v1883 = vlaneseq
          %v1884 = vshrl.u32 %v1883, 7
          %v1885 = vsub.s32 7, %v1884
          %v1886 = vrot.slane %v1129, %v1885
          %v1887 = vmul.f32 %v1873, %v1882
          %v1888 = vmul.f32 %v1873, %v1886
          %v1889 = vmul.f32 %v1877, %v1882
          %v1890 = vmul.f32 %v1877, %v1886
          %v1891 = vld [vmem:[%s1456] sm:$0xff]
          %v1892 = vld [vmem:[%s1456 + $0x8] sm:$0xff]
          %v1893 = vld [vmem:[%s1456 + $0x10] sm:$0xff]
          %v1894 = vld [vmem:[%s1456 + $0x18] sm:$0xff]
          %v1895 = vmul.f32 %v1841, %v1891
          %v1896 = vmul.f32 %v1842, %v1892
          %v1897 = vmul.f32 %v1843, %v1893
          %v1898 = vmul.f32 %v1844, %v1894
          %v1899 = vadd.f32 %v1895, %v1887
          %v1900 = vadd.f32 %v1896, %v1888
          %v1901 = vadd.f32 %v1897, %v1889
          %v1902 = vadd.f32 %v1898, %v1890
          %1903 = vset.pattern.permute.xlu0 7
          %1904 = vperm.xlu0 %1903, %v1254
          %v1905 = vpop.permute.xlu0 %1904
          %1907 = vset.pattern.permute.xlu0 7
          %1908 = vperm.xlu0 %1907, %v1259
          %v1909 = vpop.permute.xlu0 %1908
          %v1911 = vmul.f32 %v1905, %v1899
          %v1912 = vmul.f32 %v1905, %v1900
          %v1913 = vmul.f32 %v1909, %v1901
          %v1914 = vmul.f32 %v1909, %v1902
          %v1915 = vadd.f32 %v1911, %v1913
          %v1916 = vrot.slane %v1915, 4
          %v1917 = vadd.f32 %v1915, %v1916
          %v1918 = vrot.slane %v1917, 2
          %v1919 = vadd.f32 %v1917, %v1918
          %v1920 = vrot.slane %v1919, 1
          %v1921 = vadd.f32 %v1919, %v1920
          %v1922 = vadd.f32 %v1912, %v1914
          %v1923 = vrot.slane %v1922, 4
          %v1924 = vadd.f32 %v1922, %v1923
          %v1925 = vrot.slane %v1924, 2
          %v1926 = vadd.f32 %v1924, %v1925
          %v1927 = vrot.slane %v1926, 1
          %v1928 = vadd.f32 %v1926, %v1927
          %vm1929 = vcmask 1040384
          %v1930 = vsel %vm1929, %v1515, %v1573
          %v1931 = vsel %vm1929, %v1522, %v1580
          %vm1932 = vcmask 1041408
          %v1933 = vsel %vm1932, %v1930, %v1631
          %v1934 = vsel %vm1932, %v1931, %v1638
          %vm1935 = vcmask 1042432
          %v1936 = vsel %vm1935, %v1933, %v1689
          %v1937 = vsel %vm1935, %v1934, %v1696
          %vm1938 = vcmask 1043456
          %v1939 = vsel %vm1938, %v1936, %v1747
          %v1940 = vsel %vm1938, %v1937, %v1754
          %vm1941 = vcmask 1044480
          %v1942 = vsel %vm1941, %v1939, %v1805
          %v1943 = vsel %vm1941, %v1940, %v1812
          %vm1944 = vcmask 1045504
          %v1945 = vsel %vm1944, %v1942, %v1863
          %v1946 = vsel %vm1944, %v1943, %v1870
          %vm1947 = vcmask 1046528
          %v1948 = vsel %vm1947, %v1945, %v1921
          %v1949 = vsel %vm1947, %v1946, %v1928
          %s1950 = smul.addr %s1119, 8
          %s1951 = scalar_lea.vmem [#allocation5], %s1950
          %1952 = vst [vmem:[%s1951] sm:$0xff] %v1948
          %1953 = vst [vmem:[%s1951 + $0x8] sm:$0xff] %v1949
        $region93: #{tpu_custom_call.1} parent=63 // loop_footer
          %s1111 = sadd.s32 1, %s1107
        $region94: #{tpu_custom_call.1} parent=63 // loop_footer_branch
          %1106 = sbr.rel target = $region90
        $region95: #{tpu_custom_call.1} parent=63 // loop_exit
          _
        %1954 = vst [vmem:[#allocation8] sm:$0xff] %v1112
        %1955 = vst [vmem:[#allocation8 + $0x8] sm:$0xff] %v1113
        %1956 = vst [vmem:[#allocation8 + $0x10] sm:$0xff] %v1114
        %1957 = vst [vmem:[#allocation8 + $0x18] sm:$0xff] %v1115
        %v1958 = vld [vmem:[#allocation5] sm:$0xff]
        %v1959 = vld [vmem:[#allocation5 + $0x8] sm:$0xff]
        %v1960 = vld [vmem:[#allocation5 + $0x10] sm:$0xff]
        %v1961 = vld [vmem:[#allocation5 + $0x18] sm:$0xff]
        %v1962 = vld [vmem:[%s10] sm:$0x3]
        %v1963 = vld [vmem:[#allocation2] sm:$0xff]
        %v1964 = vld [vmem:[#allocation2 + $0x8] sm:$0xff]
        %v1965 = vld [vmem:[#allocation2 + $0x10] sm:$0xff]
        %v1966 = vld [vmem:[#allocation2 + $0x18] sm:$0xff]
        %v1968 = vlaneseq
        %v1969 = vshrl.u32 %v1968, 7
        %v1970 = vsub.s32 0, %v1969
        %v1971 = vrot.slane %v1962, %v1970
        %v1972 = vlaneseq
        %v1973 = vshrl.u32 %v1972, 7
        %v1974 = vsub.s32 1, %v1973
        %v1975 = vrot.slane %v1962, %v1974
        %v1978 = vmul.f32 %v1971, %v1963
        %v1979 = vmul.f32 %v1975, %v1964
        %v1980 = vmul.f32 %v1971, %v1965
        %v1981 = vmul.f32 %v1975, %v1966
        %v1982 = vadd.f32 %v1958, %v1978
        %v1983 = vadd.f32 %v1959, %v1979
        %v1984 = vadd.f32 %v1960, %v1980
        %v1985 = vadd.f32 %v1961, %v1981
        %v1986 = vld [vmem:[#allocation6] sm:$0xff]
        %v1987 = vld [vmem:[#allocation6 + $0x8] sm:$0xff]
        %v1988 = vld [vmem:[#allocation6 + $0x10] sm:$0xff]
        %v1989 = vld [vmem:[#allocation6 + $0x18] sm:$0xff]
        %v1990 = vmul.f32 %v1982, %v1986
        %v1991 = vmul.f32 %v1983, %v1987
        %v1992 = vmul.f32 %v1984, %v1988
        %v1993 = vmul.f32 %v1985, %v1989
        %v1994 = vld [vmem:[%s7] sm:$0xff]
        %v1995 = vld [vmem:[%s7 + $0x8] sm:$0xff]
        %v1996 = vld [vmem:[%s7 + $0x10] sm:$0xff]
        %v1997 = vld [vmem:[%s7 + $0x18] sm:$0xff]
        %v1998 = vld [vmem:[%s7 + $0x20] sm:$0xff]
        %v1999 = vld [vmem:[%s7 + $0x28] sm:$0xff]
        %v2000 = vld [vmem:[%s7 + $0x30] sm:$0xff]
        %v2001 = vld [vmem:[%s7 + $0x38] sm:$0xff]
        %v2002 = vld [vmem:[%s7 + $0x40] sm:$0xff]
        %v2003 = vld [vmem:[%s7 + $0x48] sm:$0xff]
        %v2004 = vld [vmem:[%s7 + $0x50] sm:$0xff]
        %v2005 = vld [vmem:[%s7 + $0x58] sm:$0xff]
        %v2006 = vld [vmem:[%s7 + $0x60] sm:$0xff]
        %v2007 = vld [vmem:[%s7 + $0x68] sm:$0xff]
        %v2008 = vld [vmem:[%s7 + $0x70] sm:$0xff]
        %v2009 = vld [vmem:[%s7 + $0x78] sm:$0xff]
        %v2010 = vld [vmem:[%s7 + $0x80] sm:$0xff]
        %v2011 = vld [vmem:[%s7 + $0x88] sm:$0xff]
        %v2012 = vld [vmem:[%s7 + $0x90] sm:$0xff]
        %v2013 = vld [vmem:[%s7 + $0x98] sm:$0xff]
        %v2014 = vld [vmem:[%s7 + $0xa0] sm:$0xff]
        %v2015 = vld [vmem:[%s7 + $0xa8] sm:$0xff]
        %v2016 = vld [vmem:[%s7 + $0xb0] sm:$0xff]
        %v2017 = vld [vmem:[%s7 + $0xb8] sm:$0xff]
        %v2018 = vld [vmem:[%s7 + $0xc0] sm:$0xff]
        %v2019 = vld [vmem:[%s7 + $0xc8] sm:$0xff]
        %v2020 = vld [vmem:[%s7 + $0xd0] sm:$0xff]
        %v2021 = vld [vmem:[%s7 + $0xd8] sm:$0xff]
        %v2022 = vld [vmem:[%s7 + $0xe0] sm:$0xff]
        %v2023 = vld [vmem:[%s7 + $0xe8] sm:$0xff]
        %v2024 = vld [vmem:[%s7 + $0xf0] sm:$0xff]
        %v2025 = vld [vmem:[%s7 + $0xf8] sm:$0xff]
        %v2026 = vld [vmem:[#allocation17] sm:$0x1]
        %v2028 = vlaneseq
        %v2029 = vshrl.u32 %v2028, 7
        %v2030 = vsub.s32 0, %v2029
        %v2031 = vrot.slane %v2026, %v2030
        %2033 = vmatprep.subr.mxu0 0.0
        %2034 = vmatpush1.msra.mxu0 %v1994
        %2035 = vmatprep.subr.mxu0 0.0
        %2036 = vmatpush1.msra.mxu0 %v1995
        %2037 = vmatprep.subr.mxu0 0.0
        %2038 = vmatpush1.msra.mxu0 %v1996
        %2039 = vmatprep.subr.mxu0 0.0
        %2040 = vmatpush1.msra.mxu0 %v1997
        %2041 = vmatprep.subr.mxu0 0.0
        %2042 = vmatpush1.msra.mxu0 %v1998
        %2043 = vmatprep.subr.mxu0 0.0
        %2044 = vmatpush1.msra.mxu0 %v1999
        %2045 = vmatprep.subr.mxu0 0.0
        %2046 = vmatpush1.msra.mxu0 %v2000
        %2047 = vmatprep.subr.mxu0 0.0
        %2048 = vmatpush1.msra.mxu0 %v2001
        %2049 = vmatprep.subr.mxu0 0.0
        %2050 = vmatpush1.msra.mxu0 %v2002
        %2051 = vmatprep.subr.mxu0 0.0
        %2052 = vmatpush1.msra.mxu0 %v2003
        %2053 = vmatprep.subr.mxu0 0.0
        %2054 = vmatpush1.msra.mxu0 %v2004
        %2055 = vmatprep.subr.mxu0 0.0
        %2056 = vmatpush1.msra.mxu0 %v2005
        %2057 = vmatprep.subr.mxu0 0.0
        %2058 = vmatpush1.msra.mxu0 %v2006
        %2059 = vmatprep.subr.mxu0 0.0
        %2060 = vmatpush1.msra.mxu0 %v2007
        %2061 = vmatprep.subr.mxu0 0.0
        %2062 = vmatpush1.msra.mxu0 %v2008
        %2063 = vmatprep.subr.mxu0 0.0
        %2064 = vmatpush1.msra.mxu0 %v2009
        %2065 = vmatprep.subr.mxu0 0.0
        %2066 = vmatpush1.msra.mxu0 %v2010
        %2067 = vmatprep.subr.mxu0 0.0
        %2068 = vmatpush1.msra.mxu0 %v2011
        %2069 = vmatprep.subr.mxu0 0.0
        %2070 = vmatpush1.msra.mxu0 %v2012
        %2071 = vmatprep.subr.mxu0 0.0
        %2072 = vmatpush1.msra.mxu0 %v2013
        %2073 = vmatprep.subr.mxu0 0.0
        %2074 = vmatpush1.msra.mxu0 %v2014
        %2075 = vmatprep.subr.mxu0 0.0
        %2076 = vmatpush1.msra.mxu0 %v2015
        %2077 = vmatprep.subr.mxu0 0.0
        %2078 = vmatpush1.msra.mxu0 %v2016
        %2079 = vmatprep.subr.mxu0 0.0
        %2080 = vmatpush1.msra.mxu0 %v2017
        %2081 = vmatprep.subr.mxu0 0.0
        %2082 = vmatpush1.msra.mxu0 %v2018
        %2083 = vmatprep.subr.mxu0 0.0
        %2084 = vmatpush1.msra.mxu0 %v2019
        %2085 = vmatprep.subr.mxu0 0.0
        %2086 = vmatpush1.msra.mxu0 %v2020
        %2087 = vmatprep.subr.mxu0 0.0
        %2088 = vmatpush1.msra.mxu0 %v2021
        %2089 = vmatprep.subr.mxu0 0.0
        %2090 = vmatpush1.msra.mxu0 %v2022
        %2091 = vmatprep.subr.mxu0 0.0
        %2092 = vmatpush1.msra.mxu0 %v2023
        %2093 = vmatprep.subr.mxu0 0.0
        %2094 = vmatpush1.msra.mxu0 %v2024
        %2095 = vmatprep.subr.mxu0 0.0
        %2096 = vmatpush1.msra.mxu0 %v2025
        %2097 = vmatprep.mubr.f32.mxu0 %v1991
        %2098 = vmatmul.mubr.f32.gmra.mrb[0].mxu0 %v1990
        %v2099 = vpop.f32.mrb[0].mxu0
        %v2100 = vadd.f32 %v2031, %v2099
        %v2101 = vpop.f32.mrb[0].mxu0
        %2102 = vmatprep.mubr.f32.mxu0 %v1993
        %2103 = vmatmul.mubr.f32.gmra.mrb[0].mxu0 %v1992
        %v2104 = vpop.f32.mrb[0].mxu0
        %v2105 = vadd.f32 %v2031, %v2104
        %v2106 = vpop.f32.mrb[0].mxu0
        %2107 = vdwg.mxu0
        %2108 = vst [vmem:[%s471] sm:$0xff] %v2100
        %2109 = vst [vmem:[%s471 + $0x8] sm:$0xff] %v2105
        %s2110 = sand.u32 %s288, 1
        %s2111 = scalar_lea.sflag [#allocation11], %s2110
        %s2112 = sand.u32 %s288, 1
        %s2113 = smul.addr %s2112, 16
        %s2114 = scalar_lea.vmem [#allocation18], %s2113
        // Predicated region
        $region96: #{tpu_custom_call.1} parent=63 // pred_check
          %p2115 = pneg %p298
        $region97: #{tpu_custom_call.1} parent=63 // pred_check_branch
          %2117 = sbr.rel (%p2115) target = $region99
        $region98: #{tpu_custom_call.1} parent=63 // pred_region
          %s2118 = smul.u32 2, %s33
          %s2120 = ssub.s32 256, 256
          %2121 = vsyncadd %s2111, %s2120
          %s2122 = smul.addr %s32, 4
          %s2123 = sadd.s32 %s2118, %s2122
          %s2124 = smul.addr %s2123, 128
          %s2125 = scalar_lea.hbm %s11, %s2124
          %s2126 = sshll.u32 %s2114, 4
          %s2127 = int_to_ptr.vmem [resolvable:$true] %s2126
          %2132 = dma.vmem_to_hbm [thread:$0]  %s2127, 256, %s2125, %s2111, 128, 128, 8
        $region99: #{tpu_custom_call.1} parent=63 // pred_fallthru
          _
      $region64: #{tpu_custom_call.1} parent=5 // pred_fallthru
        _
      %p2133 = scmp.le.s32.totalorder 2, %s23
      // Predicated region
      $region100: #{tpu_custom_call.1} parent=5 // pred_check
        %p2134 = pneg %p2133
      $region101: #{tpu_custom_call.1} parent=5 // pred_check_branch
        %2136 = sbr.rel (%p2134) target = $region103
      $region102: #{tpu_custom_call.1} parent=5 // pred_region
        %s2137 = ssub.s32 %s23, 2
        // Predicated region
        $region104: #{tpu_custom_call.1} parent=102 // pred_check
          %p2138 = pneg %p304
        $region105: #{tpu_custom_call.1} parent=102 // pred_check_branch
          %2140 = sbr.rel (%p2138) target = $region107
        $region106: #{tpu_custom_call.1} parent=102 // pred_region
          %s2141 = sand.u32 %s289, 1
          %s2142 = scalar_lea.sflag [#allocation11], %s2141
          %s2143 = sand.u32 %s289, 1
          %s2144 = smul.addr %s2143, 16
          %s2145 = scalar_lea.vmem [#allocation18], %s2144
          %2146 = dma.done %s2142, 256
        $region107: #{tpu_custom_call.1} parent=102 // pred_fallthru
          _
      $region103: #{tpu_custom_call.1} parent=5 // pred_fallthru
        _
    $region6: #{tpu_custom_call.1} parent=1 // loop_footer
      %s27 = sadd.s32 1, %s23
    $region7: #{tpu_custom_call.1} parent=1 // loop_footer_branch
      %22 = sbr.rel target = $region3
    $region8: #{tpu_custom_call.1} parent=1 // loop_exit
      _
    %2147 = vsyncpa [#allocation10], 1
    %s2148 = scalar_lea.sflag [#allocation10], 1
    %2149 = vsyncpa %s2148, 1
    %2150 = vsyncpa [#allocation13], 1
    %2151 = vsyncpa [#allocation16], 1
    %2152 = vsyncpa [#allocation11], 1
    %s2153 = scalar_lea.sflag [#allocation11], 1
    %2154 = vsyncpa %s2153, 1

</llo_original>
